<compile_context>
chip_gen: v7x
topology: tpu7x:2x2x1
jax: 0.10.0
libtpu: 0.0.40
codegen_flags: <defaults>
</compile_context>

<pallas_src>
import jax
import jax.numpy as jnp
from jax.experimental import pallas as pl
from jax.experimental.pallas import tpu as pltpu

H1 = 1024
H2 = 512
BN_EPS = 1e-5
LANE = 128
SUBLANE = 8
MAX_ROW_TILE = 2048            # safe for v7x's 64 MiB VMEM (est. ~24 MiB at 2048)
VMEM_LIMIT_BYTES = 48 * 1024 * 1024


def adaptive_mlp_kernel(x_ref, w1_ref, t1_ref, w2_ref, t2_ref, w3_ref, b3_ref, o_ref):
    """Fused: relu(x@W1'+t1) -> relu(.@W2'+t2) -> .@W3 + b3 (bf16 dots/staging, f32 acc)."""
    x = x_ref[...].astype(jnp.bfloat16)

    # Layer 1: Linear with folded BN scale, additive shift, ReLU (dropout = identity).
    # f32 add/ReLU epilogue (works on v5e's f32-only VPU), bf16 staged intermediate.
    h1 = jnp.dot(x, w1_ref[...], preferred_element_type=jnp.float32)
    h1 = jnp.maximum(h1 + t1_ref[...], 0.0).astype(jnp.bfloat16)

    # Layer 2.
    h2 = jnp.dot(h1, w2_ref[...], preferred_element_type=jnp.float32)
    h2 = jnp.maximum(h2 + t2_ref[...], 0.0).astype(jnp.bfloat16)

    # Output head (lane-padded to a multiple of 128).
    out = jnp.dot(h2, w3_ref[...], preferred_element_type=jnp.float32)
    o_ref[...] = (out + b3_ref[...]).astype(o_ref.dtype)


def _round_up(n, m):
    return ((n + m - 1) // m) * m


def _choose_row_tile(B, max_tile=MAX_ROW_TILE):
    """Pick (block_b, padded_B).

    Guarantees: block_b % 8 == 0, padded_B % block_b == 0, and >= 2 grid steps
    whenever B >= 16 so v7x's two TensorCores both get work, while using tiles
    as large as max_tile for big batches to amortize per-grid-step overhead.
    """
    B8 = _round_up(max(B, 1), SUBLANE)
    if B8 <= SUBLANE:                       # tiny batch: single tile, latency regime
        return SUBLANE, SUBLANE
    n_steps = max(2, -(-B8 // max_tile))    # ceil-div, but at least 2 steps
    block = _round_up(-(-B8 // n_steps), SUBLANE)
    return block, n_steps * block


def adaptive_mlp_forward(x, params, *, block_b=None, max_tile=MAX_ROW_TILE):
    """x: (B, input_dim) float32. Returns logits (B, num_classes) float32."""
    B, Din = x.shape
    w1, t1, w2, t2, w3, b3, num_classes = params
    din_pad = w1.shape[0]
    out_pad = w3.shape[1]
    assert Din <= din_pad, "input feature dim exceeds prepared (padded) W1 rows"

    if block_b is None:
        block_b, b_pad = _choose_row_tile(B, max_tile=max_tile)
    else:
        block_b = max(SUBLANE, _round_up(block_b, SUBLANE))
        b_pad = _round_up(B, block_b)

    # Zero-pad rows (awkward batch sizes) and input features (lane-dense K).
    if (b_pad, din_pad) != (B, Din):
        x = jnp.pad(x, ((0, b_pad - B), (0, din_pad - Din)))

    grid = (b_pad // block_b,)
    const = lambda i: (0, 0)  # grid-invariant weights / shifts (fetched once)

    out_padded = pl.pallas_call(
        adaptive_mlp_kernel,
        out_shape=jax.ShapeDtypeStruct((b_pad, out_pad), jnp.float32),
        grid_spec=pltpu.PrefetchScalarGridSpec(
            num_scalar_prefetch=0,
            grid=grid,
            in_specs=[
                pl.BlockSpec((block_b, din_pad), lambda i: (i, 0)),  # x row tile
                pl.BlockSpec((din_pad, H1), const),                  # W1 (BN folded, bf16)
                pl.BlockSpec((1, H1), const),                        # shift1 (f32)
                pl.BlockSpec((H1, H2), const),                       # W2 (bf16)
                pl.BlockSpec((1, H2), const),                        # shift2 (f32)
                pl.BlockSpec((H2, out_pad), const),                  # W3 padded (bf16)
                pl.BlockSpec((1, out_pad), const),                   # b3 padded (f32)
            ],
            out_specs=pl.BlockSpec((block_b, out_pad), lambda i: (i, 0)),
        ),
        compiler_params=pltpu.CompilerParams(
            dimension_semantics=("parallel",),
            vmem_limit_bytes=VMEM_LIMIT_BYTES,
        ),
    )(x, w1, t1, w2, t2, w3, b3)

    return out_padded[:B, :num_classes]


def init_params(key, input_dim, num_classes):
    """Deterministic synthetic parameters (shapes match nn.Module.__init__)."""
    ks = jax.random.split(key, 12)
    f32 = jnp.float32

    def lin(kw, kb, fan_in, fan_out):
        bound = 1.0 / jnp.sqrt(fan_in)
        w = jax.random.uniform(kw, (fan_in, fan_out), f32, -bound, bound)
        b = jax.random.uniform(kb, (fan_out,), f32, -bound, bound)
        return w, b

    w1, b1 = lin(ks[0], ks[1], input_dim, H1)
    w2, b2 = lin(ks[2], ks[3], H1, H2)
    w3, b3 = lin(ks[4], ks[5], H2, num_classes)

    # BatchNorm1d params + running stats (nontrivial, deterministic).
    g1 = 1.0 + 0.1 * jax.random.normal(ks[6], (H1,), f32)
    be1 = 0.1 * jax.random.normal(ks[7], (H1,), f32)
    rm1 = 0.1 * jax.random.normal(ks[8], (H1,), f32)
    rv1 = 1.0 + 0.1 * jax.random.uniform(ks[9], (H1,), f32)

    g2 = 1.0 + 0.1 * jax.random.normal(ks[10], (H2,), f32)
    be2 = 0.1 * jax.random.normal(ks[11], (H2,), f32)
    rm2 = jnp.zeros((H2,), f32)
    rv2 = jnp.ones((H2,), f32)

    raw = dict(w1=w1, b1=b1, g1=g1, be1=be1, rm1=rm1, rv1=rv1,
               w2=w2, b2=b2, g2=g2, be2=be2, rm2=rm2, rv2=rv2,
               w3=w3, b3=b3)
    return raw


def prepare_params(raw, num_classes):
    """Fold BN (eval mode) into weights/shifts, pad Din & head to 128 lanes, cast to bf16.

    BN(x@W + b) = (x@W) * s + ((b - rm) * s + beta) with s = gamma / sqrt(rv + eps)
                = x @ (W * s) + t
    """
    def fold(w, b, gamma, beta, rmean, rvar):
        s = gamma / jnp.sqrt(rvar + BN_EPS)
        w_f = (w * s[None, :]).astype(jnp.float32)
        t = ((b - rmean) * s + beta).reshape(1, -1).astype(jnp.float32)
        return w_f, t

    w1f, t1 = fold(raw["w1"], raw["b1"], raw["g1"], raw["be1"], raw["rm1"], raw["rv1"])
    w2f, t2 = fold(raw["w2"], raw["b2"], raw["g2"], raw["be2"], raw["rm2"], raw["rv2"])

    # Lane-dense input: zero-pad W1 rows so Din -> multiple of 128 (x gets zero cols).
    din = w1f.shape[0]
    din_pad = _round_up(din, LANE)
    if din_pad != din:
        w1f = jnp.zeros((din_pad, H1), jnp.float32).at[:din, :].set(w1f)
    w1f = w1f.astype(jnp.bfloat16)
    w2f = w2f.astype(jnp.bfloat16)

    # Lane-dense output head: pad num_classes -> multiple of 128 with zeros.
    out_pad = _round_up(num_classes, LANE)
    w3p = jnp.zeros((H2, out_pad), jnp.float32).at[:, :num_classes].set(raw["w3"])
    b3p = jnp.zeros((1, out_pad), jnp.float32).at[0, :num_classes].set(raw["b3"])
    w3p = w3p.astype(jnp.bfloat16)

    return (w1f, t1, w2f, t2, w3p, b3p, num_classes)


def reference_forward_f32(x, raw):
    """Pure-JAX f32 eval-mode reference matching PyTorch semantics."""
    def bn(z, g, b, m, v):
        return (z - m) / jnp.sqrt(v + BN_EPS) * g + b
    h = x @ raw["w1"] + raw["b1"]
    h = jnp.maximum(bn(h, raw["g1"], raw["be1"], raw["rm1"], raw["rv1"]), 0.0)
    h = h @ raw["w2"] + raw["b2"]
    h = jnp.maximum(bn(h, raw["g2"], raw["be2"], raw["rm2"], raw["rv2"]), 0.0)
    return h @ raw["w3"] + raw["b3"]


def reference_forward_bf16(x, params):
    """Pure-JAX reference reproducing the kernel's bf16-dot / f32-accumulate numerics."""
    w1, t1, w2, t2, w3, b3, num_classes = params
    din = x.shape[1]
    h = jnp.dot(x.astype(jnp.bfloat16), w1[:din, :], preferred_element_type=jnp.float32)
    h = jnp.maximum(h + t1, 0.0).astype(jnp.bfloat16)
    h = jnp.dot(h, w2, preferred_element_type=jnp.float32)
    h = jnp.maximum(h + t2, 0.0).astype(jnp.bfloat16)
    y = jnp.dot(h, w3, preferred_element_type=jnp.float32) + b3
    return y[:, :num_classes]


if __name__ == "__main__":
    key = jax.random.PRNGKey(0)
    k_x, k_p = jax.random.split(key)

    B, INPUT_DIM, NUM_CLASSES = 8, 32, 10
    x = jax.random.normal(k_x, (B, INPUT_DIM), jnp.float32)

    raw = init_params(k_p, INPUT_DIM, NUM_CLASSES)
    params = prepare_params(raw, NUM_CLASSES)

    out = adaptive_mlp_forward(x, params)
    out = jax.block_until_ready(out)
    assert out.shape == (B, NUM_CLASSES)

    # Tight check against a reference with identical bf16-dot numerics.
    ref_bf16 = reference_forward_bf16(x, params)
    assert jnp.allclose(out, ref_bf16, atol=1e-3, rtol=1e-3), "mismatch vs bf16 reference"

    # Loose check against the full-f32 PyTorch-semantics reference (bf16 matmul noise).
    ref_f32 = reference_forward_f32(x, raw)
    assert jnp.allclose(out, ref_f32, atol=5e-2, rtol=5e-2), "mismatch vs f32 reference"

    # Sanity-check the tiled/padded path (multi-step grid, awkward row count).
    B2 = 300
    x2 = jax.random.normal(jax.random.PRNGKey(1), (B2, INPUT_DIM), jnp.float32)
    out2 = jax.block_until_ready(adaptive_mlp_forward(x2, params))
    assert out2.shape == (B2, NUM_CLASSES)
    assert jnp.allclose(out2, reference_forward_bf16(x2, params), atol=1e-3, rtol=1e-3), \
        "mismatch vs bf16 reference (tiled path)"

    print("KERNEL_OK")
</pallas_src>

<mosaic_0001>
module attributes {stable_mosaic.version = 11 : i64} {
  func.func @adaptive_mlp_kernel(%arg0: i32, %arg1: memref<8x128xf32, #tpu.memory_space<vmem>>, %arg2: memref<128x1024xbf16, #tpu.memory_space<vmem>>, %arg3: memref<1x1024xf32, #tpu.memory_space<vmem>>, %arg4: memref<1024x512xbf16, #tpu.memory_space<vmem>>, %arg5: memref<1x512xf32, #tpu.memory_space<vmem>>, %arg6: memref<512x128xbf16, #tpu.memory_space<vmem>>, %arg7: memref<1x128xf32, #tpu.memory_space<vmem>>, %arg8: memref<8x128xf32, #tpu.memory_space<vmem>>) attributes {dimension_semantics = [#tpu.dimension_semantics<parallel>], iteration_bounds = array<i64: 1>, scalar_prefetch = 0 : i64, scratch_operands = 0 : i64, tpu.core_type = #tpu.core_type<tc>, window_params = [{transform_indices = @transform_0, window_bounds = array<i64: 8, 128>}, {pipeline_mode = #tpu.pipeline_mode<synchronous>, transform_indices = @transform_1, window_bounds = array<i64: 128, 1024>}, {pipeline_mode = #tpu.pipeline_mode<synchronous>, transform_indices = @transform_2, window_bounds = array<i64: 1, 1024>}, {pipeline_mode = #tpu.pipeline_mode<synchronous>, transform_indices = @transform_3, window_bounds = array<i64: 1024, 512>}, {pipeline_mode = #tpu.pipeline_mode<synchronous>, transform_indices = @transform_4, window_bounds = array<i64: 1, 512>}, {pipeline_mode = #tpu.pipeline_mode<synchronous>, transform_indices = @transform_5, window_bounds = array<i64: 512, 128>}, {pipeline_mode = #tpu.pipeline_mode<synchronous>, transform_indices = @transform_6, window_bounds = array<i64: 1, 128>}, {transform_indices = @transform_7, window_bounds = array<i64: 8, 128>}]} {
    %c0 = arith.constant 0 : index
    %c0_0 = arith.constant 0 : index
    %0 = vector.load %arg1[%c0, %c0_0] : memref<8x128xf32, #tpu.memory_space<vmem>>, vector<8x128xf32>
    %1 = arith.truncf %0 : vector<8x128xf32> to vector<8x128xbf16>
    %c0_1 = arith.constant 0 : index
    %c0_2 = arith.constant 0 : index
    %2 = vector.load %arg2[%c0_1, %c0_2] : memref<128x1024xbf16, #tpu.memory_space<vmem>>, vector<128x1024xbf16>
    %cst = arith.constant dense<0.000000e+00> : vector<8x1024xf32>
    %3 = tpu.matmul %1, %2, %cst {dimension_numbers = #tpu.dot_dimension_numbers<[1], [0], [0], [1], [0, 0, 1, 1], [], []>} : vector<8x128xbf16>, vector<128x1024xbf16>, vector<8x1024xf32> -> vector<8x1024xf32>
    %c0_3 = arith.constant 0 : index
    %c0_4 = arith.constant 0 : index
    %4 = vector.load %arg3[%c0_3, %c0_4] : memref<1x1024xf32, #tpu.memory_space<vmem>>, vector<1x1024xf32>
    %5 = vector.broadcast %4 : vector<1x1024xf32> to vector<8x1024xf32>
    %6 = arith.addf %3, %5 : vector<8x1024xf32>
    %cst_5 = arith.constant 0.000000e+00 : f32
    %7 = vector.broadcast %cst_5 : f32 to vector<8x1024xf32>
    %8 = arith.maximumf %6, %7 : vector<8x1024xf32>
    %9 = arith.truncf %8 : vector<8x1024xf32> to vector<8x1024xbf16>
    %c0_6 = arith.constant 0 : index
    %c0_7 = arith.constant 0 : index
    %10 = vector.load %arg4[%c0_6, %c0_7] : memref<1024x512xbf16, #tpu.memory_space<vmem>>, vector<1024x512xbf16>
    %cst_8 = arith.constant dense<0.000000e+00> : vector<8x512xf32>
    %11 = tpu.matmul %9, %10, %cst_8 {dimension_numbers = #tpu.dot_dimension_numbers<[1], [0], [0], [1], [0, 0, 1, 1], [], []>} : vector<8x1024xbf16>, vector<1024x512xbf16>, vector<8x512xf32> -> vector<8x512xf32>
    %c0_9 = arith.constant 0 : index
    %c0_10 = arith.constant 0 : index
    %12 = vector.load %arg5[%c0_9, %c0_10] : memref<1x512xf32, #tpu.memory_space<vmem>>, vector<1x512xf32>
    %13 = vector.broadcast %12 : vector<1x512xf32> to vector<8x512xf32>
    %14 = arith.addf %11, %13 : vector<8x512xf32>
    %cst_11 = arith.constant 0.000000e+00 : f32
    %15 = vector.broadcast %cst_11 : f32 to vector<8x512xf32>
    %16 = arith.maximumf %14, %15 : vector<8x512xf32>
    %17 = arith.truncf %16 : vector<8x512xf32> to vector<8x512xbf16>
    %c0_12 = arith.constant 0 : index
    %c0_13 = arith.constant 0 : index
    %18 = vector.load %arg6[%c0_12, %c0_13] : memref<512x128xbf16, #tpu.memory_space<vmem>>, vector<512x128xbf16>
    %cst_14 = arith.constant dense<0.000000e+00> : vector<8x128xf32>
    %19 = tpu.matmul %17, %18, %cst_14 {dimension_numbers = #tpu.dot_dimension_numbers<[1], [0], [0], [1], [0, 0, 1, 1], [], []>} : vector<8x512xbf16>, vector<512x128xbf16>, vector<8x128xf32> -> vector<8x128xf32>
    %c0_15 = arith.constant 0 : index
    %c0_16 = arith.constant 0 : index
    %20 = vector.load %arg7[%c0_15, %c0_16] : memref<1x128xf32, #tpu.memory_space<vmem>>, vector<1x128xf32>
    %21 = vector.broadcast %20 : vector<1x128xf32> to vector<8x128xf32>
    %22 = arith.addf %19, %21 : vector<8x128xf32>
    %c0_17 = arith.constant 0 : index
    %c0_18 = arith.constant 0 : index
    %23 = vector.load %arg8[%c0_17, %c0_18] : memref<8x128xf32, #tpu.memory_space<vmem>>, vector<8x128xf32>
    tpu.vector_store %arg8[%c0_17, %c0_18], %22 {strides = array<i32>} : memref<8x128xf32, #tpu.memory_space<vmem>>, vector<8x128xf32>,
    return
  }
  func.func @transform_0(%arg0: i32) -> (i32, i32) {
    %c0_i32 = arith.constant 0 : i32
    %c0_i32_0 = arith.constant 0 : i32
    return %arg0, %c0_i32 : i32, i32
  }
  func.func @transform_1(%arg0: i32) -> (i32, i32) {
    %c0_i32 = arith.constant 0 : i32
    %c0_i32_0 = arith.constant 0 : i32
    %c0_i32_1 = arith.constant 0 : i32
    return %c0_i32, %c0_i32_0 : i32, i32
  }
  func.func @transform_2(%arg0: i32) -> (i32, i32) {
    %c0_i32 = arith.constant 0 : i32
    %c0_i32_0 = arith.constant 0 : i32
    %c0_i32_1 = arith.constant 0 : i32
    return %c0_i32, %c0_i32_0 : i32, i32
  }
  func.func @transform_3(%arg0: i32) -> (i32, i32) {
    %c0_i32 = arith.constant 0 : i32
    %c0_i32_0 = arith.constant 0 : i32
    %c0_i32_1 = arith.constant 0 : i32
    return %c0_i32, %c0_i32_0 : i32, i32
  }
  func.func @transform_4(%arg0: i32) -> (i32, i32) {
    %c0_i32 = arith.constant 0 : i32
    %c0_i32_0 = arith.constant 0 : i32
    %c0_i32_1 = arith.constant 0 : i32
    return %c0_i32, %c0_i32_0 : i32, i32
  }
  func.func @transform_5(%arg0: i32) -> (i32, i32) {
    %c0_i32 = arith.constant 0 : i32
    %c0_i32_0 = arith.constant 0 : i32
    %c0_i32_1 = arith.constant 0 : i32
    return %c0_i32, %c0_i32_0 : i32, i32
  }
  func.func @transform_6(%arg0: i32) -> (i32, i32) {
    %c0_i32 = arith.constant 0 : i32
    %c0_i32_0 = arith.constant 0 : i32
    %c0_i32_1 = arith.constant 0 : i32
    return %c0_i32, %c0_i32_0 : i32, i32
  }
  func.func @transform_7(%arg0: i32) -> (i32, i32) {
    %c0_i32 = arith.constant 0 : i32
    %c0_i32_0 = arith.constant 0 : i32
    return %arg0, %c0_i32 : i32, i32
  }
}

</mosaic_0001>

<llo_original>
// kernel: tpu_custom_call.1
$region0: #{tpu_custom_call.1}
  #allocation0 [shape = 'u32[]', space=smem, size = 0x4, offset = 0x4, fixed_abs, tag = 'smem constant byte address 0x4 - core index']
  #allocation1 [shape = 'u32[144,128]{1,0:T(1,128)}', space=vmem, size = 0x12000, scoped, tag = 'internal scratch']
  %s0 = inlined_call_operand.hbm [shape: f32[8,128], index: 0, kind: input, shape index: {}]
  %s1 = inlined_call_operand.hbm [shape: bf16[128,1024], index: 1, kind: input, shape index: {}]
  %s2 = inlined_call_operand.hbm [shape: f32[1,1024], index: 2, kind: input, shape index: {}]
  %s3 = inlined_call_operand.hbm [shape: bf16[1024,512], index: 3, kind: input, shape index: {}]
  %s4 = inlined_call_operand.vmem [shape: f32[1,512], index: 4, kind: input, shape index: {}]
  %s5 = inlined_call_operand.hbm [shape: bf16[512,128], index: 5, kind: input, shape index: {}]
  %s6 = inlined_call_operand.vmem [shape: f32[1,128], index: 6, kind: input, shape index: {}]
  %s7 = inlined_call_operand.hbm [shape: f32[8,128], index: 7, kind: output, shape index: {}]
  %s8 = sld [smem:[#allocation0]]
  $region58: #{tpu_custom_call.1} parent=0
    _
  %s10 = ssub.s32 1, %s8
  %s11 = scalar_select 0, %s10, %s8
  $region1: #{tpu_custom_call.1} parent=0
    #allocation2 [shape = 'u8[4096]{0}', space=vmem, size = 0x1000, scoped, tag = 'input window, operand 0, single buffered']
    #allocation3 [shape = 's32[1]{0}', space=sflag, size = 0x4, scoped, tag = 'scoped memory for tpu_custom_call.1']
    #allocation4 [shape = 's32[1]{0}', space=sflag, size = 0x4, scoped, tag = 'scoped memory for tpu_custom_call.1']
    #allocation5 [shape = 'u8[262144]{0}', space=vmem, size = 0x40000, scoped, tag = 'input window, operand 1, single buffered']
    #allocation6 [shape = 's32[1]{0}', space=sflag, size = 0x4, scoped, tag = 'scoped memory for tpu_custom_call.1']
    #allocation7 [shape = 'u8[4096]{0}', space=vmem, size = 0x1000, scoped, tag = 'input window, operand 2, single buffered']
    #allocation8 [shape = 'u8[1048576]{0}', space=vmem, size = 0x100000, scoped, tag = 'input window, operand 3, single buffered']
    #allocation9 [shape = 's32[1]{0}', space=sflag, size = 0x4, scoped, tag = 'scoped memory for tpu_custom_call.1']
    #allocation10 [shape = 'u8[131072]{0}', space=vmem, size = 0x20000, scoped, tag = 'input window, operand 5, single buffered']
    #allocation11 [shape = 'u8[4096]{0}', space=vmem, size = 0x1000, scoped, tag = 'output window, operand 0, single buffered']
    %12 = vsyncpa [#allocation3], 0
    %13 = vsyncpa [#allocation6], 0
    %14 = vsyncpa [#allocation9], 0
    %15 = vsyncpa [#allocation4], 0
    // Predicated region
    $region2: #{tpu_custom_call.1} parent=1 // pred_check
      _
    $region3: #{tpu_custom_call.1} parent=1 // pred_check_branch
      %17 = sbr.rel (0) target = $region5
    $region4: #{tpu_custom_call.1} parent=1 // pred_region
      %s19 = ssub.s32 128, 128
      %20 = vsyncadd [#allocation3], %s19
      %s22 = sshll.u32 [#allocation2], 4
      %s23 = int_to_ptr.vmem [resolvable:$true] %s22
      %25 = dma.hbm_to_vmem [thread:$0]  %s0, 128, %s23, [#allocation3]
    $region5: #{tpu_custom_call.1} parent=1 // pred_fallthru
      _
    // Predicated region
    $region6: #{tpu_custom_call.1} parent=1 // pred_check
      _
    $region7: #{tpu_custom_call.1} parent=1 // pred_check_branch
      %27 = sbr.rel (0) target = $region9
    $region8: #{tpu_custom_call.1} parent=1 // pred_region
      %s29 = ssub.s32 8192, 8192
      %30 = vsyncadd [#allocation6], %s29
      %s31 = sshll.u32 [#allocation5], 4
      %s32 = int_to_ptr.vmem [resolvable:$true] %s31
      %37 = dma.hbm_to_vmem [thread:$0]  %s1, 8192, %s32, [#allocation6], 512, 512, 32
    $region9: #{tpu_custom_call.1} parent=1 // pred_fallthru
      _
    // Predicated region
    $region10: #{tpu_custom_call.1} parent=1 // pred_check
      _
    $region11: #{tpu_custom_call.1} parent=1 // pred_check_branch
      %39 = sbr.rel (0) target = $region13
    $region12: #{tpu_custom_call.1} parent=1 // pred_region
      %s41 = ssub.s32 128, 128
      %42 = vsyncadd [#allocation6], %s41
      %s44 = sshll.u32 [#allocation7], 4
      %s45 = int_to_ptr.vmem [resolvable:$true] %s44
      %47 = dma.hbm_to_vmem [thread:$0]  %s2, 128, %s45, [#allocation6]
    $region13: #{tpu_custom_call.1} parent=1 // pred_fallthru
      _
    // Predicated region
    $region14: #{tpu_custom_call.1} parent=1 // pred_check
      _
    $region15: #{tpu_custom_call.1} parent=1 // pred_check_branch
      %49 = sbr.rel (0) target = $region17
    $region16: #{tpu_custom_call.1} parent=1 // pred_region
      %s51 = ssub.s32 32768, 32768
      %52 = vsyncadd [#allocation9], %s51
      %s53 = sshll.u32 [#allocation8], 4
      %s54 = int_to_ptr.vmem [resolvable:$true] %s53
      %59 = dma.hbm_to_vmem [thread:$0]  %s3, 32768, %s54, [#allocation9], 256, 256, 16
    $region17: #{tpu_custom_call.1} parent=1 // pred_fallthru
      _
    // Predicated region
    $region18: #{tpu_custom_call.1} parent=1 // pred_check
      _
    $region19: #{tpu_custom_call.1} parent=1 // pred_check_branch
      %61 = sbr.rel (0) target = $region21
    $region20: #{tpu_custom_call.1} parent=1 // pred_region
      _
    $region21: #{tpu_custom_call.1} parent=1 // pred_fallthru
      _
    // Predicated region
    $region22: #{tpu_custom_call.1} parent=1 // pred_check
      _
    $region23: #{tpu_custom_call.1} parent=1 // pred_check_branch
      %63 = sbr.rel (0) target = $region25
    $region24: #{tpu_custom_call.1} parent=1 // pred_region
      %s65 = ssub.s32 4096, 4096
      %66 = vsyncadd [#allocation9], %s65
      %s67 = sshll.u32 [#allocation10], 4
      %s68 = int_to_ptr.vmem [resolvable:$true] %s67
      %73 = dma.hbm_to_vmem [thread:$0]  %s5, 4096, %s68, [#allocation9], 64, 64, 4
    $region25: #{tpu_custom_call.1} parent=1 // pred_fallthru
      _
    // Predicated region
    $region26: #{tpu_custom_call.1} parent=1 // pred_check
      _
    $region27: #{tpu_custom_call.1} parent=1 // pred_check_branch
      %75 = sbr.rel (0) target = $region29
    $region28: #{tpu_custom_call.1} parent=1 // pred_region
      _
    $region29: #{tpu_custom_call.1} parent=1 // pred_fallthru
      _
    // Predicated region
    $region30: #{tpu_custom_call.1} parent=1 // pred_check
      _
    $region31: #{tpu_custom_call.1} parent=1 // pred_check_branch
      %77 = sbr.rel (0) target = $region33
    $region32: #{tpu_custom_call.1} parent=1 // pred_region
      %78 = dma.done [#allocation3], 128
    $region33: #{tpu_custom_call.1} parent=1 // pred_fallthru
      _
    // Predicated region
    $region34: #{tpu_custom_call.1} parent=1 // pred_check
      _
    $region35: #{tpu_custom_call.1} parent=1 // pred_check_branch
      %80 = sbr.rel (0) target = $region37
    $region36: #{tpu_custom_call.1} parent=1 // pred_region
      %81 = dma.done [#allocation6], 8192
    $region37: #{tpu_custom_call.1} parent=1 // pred_fallthru
      _
    // Predicated region
    $region38: #{tpu_custom_call.1} parent=1 // pred_check
      _
    $region39: #{tpu_custom_call.1} parent=1 // pred_check_branch
      %83 = sbr.rel (0) target = $region41
    $region40: #{tpu_custom_call.1} parent=1 // pred_region
      %84 = dma.done [#allocation6], 128
    $region41: #{tpu_custom_call.1} parent=1 // pred_fallthru
      _
    // Predicated region
    $region42: #{tpu_custom_call.1} parent=1 // pred_check
      _
    $region43: #{tpu_custom_call.1} parent=1 // pred_check_branch
      %86 = sbr.rel (0) target = $region45
    $region44: #{tpu_custom_call.1} parent=1 // pred_region
      %87 = dma.done [#allocation9], 32768
    $region45: #{tpu_custom_call.1} parent=1 // pred_fallthru
      _
    // Predicated region
    $region46: #{tpu_custom_call.1} parent=1 // pred_check
      _
    $region47: #{tpu_custom_call.1} parent=1 // pred_check_branch
      %89 = sbr.rel (0) target = $region49
    $region48: #{tpu_custom_call.1} parent=1 // pred_region
      %90 = dma.done [#allocation9], 4096
    $region49: #{tpu_custom_call.1} parent=1 // pred_fallthru
      _
    %v92 = vld [vmem:[#allocation2] sm:$0xff]
    %v93 = vpack.c.bf16 %v92, %v92
    %v94 = vld [vmem:[#allocation5] sm:$0xff]
    %v95 = vld [vmem:[#allocation5 + $0x8] sm:$0xff]
    %v96 = vld [vmem:[#allocation5 + $0x10] sm:$0xff]
    %v97 = vld [vmem:[#allocation5 + $0x18] sm:$0xff]
    %v98 = vld [vmem:[#allocation5 + $0x20] sm:$0xff]
    %v99 = vld [vmem:[#allocation5 + $0x28] sm:$0xff]
    %v100 = vld [vmem:[#allocation5 + $0x30] sm:$0xff]
    %v101 = vld [vmem:[#allocation5 + $0x38] sm:$0xff]
    %v102 = vld [vmem:[#allocation5 + $0x40] sm:$0xff]
    %v103 = vld [vmem:[#allocation5 + $0x48] sm:$0xff]
    %v104 = vld [vmem:[#allocation5 + $0x50] sm:$0xff]
    %v105 = vld [vmem:[#allocation5 + $0x58] sm:$0xff]
    %v106 = vld [vmem:[#allocation5 + $0x60] sm:$0xff]
    %v107 = vld [vmem:[#allocation5 + $0x68] sm:$0xff]
    %v108 = vld [vmem:[#allocation5 + $0x70] sm:$0xff]
    %v109 = vld [vmem:[#allocation5 + $0x78] sm:$0xff]
    %v110 = vld [vmem:[#allocation5 + $0x80] sm:$0xff]
    %v111 = vld [vmem:[#allocation5 + $0x88] sm:$0xff]
    %v112 = vld [vmem:[#allocation5 + $0x90] sm:$0xff]
    %v113 = vld [vmem:[#allocation5 + $0x98] sm:$0xff]
    %v114 = vld [vmem:[#allocation5 + $0xa0] sm:$0xff]
    %v115 = vld [vmem:[#allocation5 + $0xa8] sm:$0xff]
    %v116 = vld [vmem:[#allocation5 + $0xb0] sm:$0xff]
    %v117 = vld [vmem:[#allocation5 + $0xb8] sm:$0xff]
    %v118 = vld [vmem:[#allocation5 + $0xc0] sm:$0xff]
    %v119 = vld [vmem:[#allocation5 + $0xc8] sm:$0xff]
    %v120 = vld [vmem:[#allocation5 + $0xd0] sm:$0xff]
    %v121 = vld [vmem:[#allocation5 + $0xd8] sm:$0xff]
    %v122 = vld [vmem:[#allocation5 + $0xe0] sm:$0xff]
    %v123 = vld [vmem:[#allocation5 + $0xe8] sm:$0xff]
    %v124 = vld [vmem:[#allocation5 + $0xf0] sm:$0xff]
    %v125 = vld [vmem:[#allocation5 + $0xf8] sm:$0xff]
    %v126 = vld [vmem:[#allocation5 + $0x100] sm:$0xff]
    %v127 = vld [vmem:[#allocation5 + $0x108] sm:$0xff]
    %v128 = vld [vmem:[#allocation5 + $0x110] sm:$0xff]
    %v129 = vld [vmem:[#allocation5 + $0x118] sm:$0xff]
    %v130 = vld [vmem:[#allocation5 + $0x120] sm:$0xff]
    %v131 = vld [vmem:[#allocation5 + $0x128] sm:$0xff]
    %v132 = vld [vmem:[#allocation5 + $0x130] sm:$0xff]
    %v133 = vld [vmem:[#allocation5 + $0x138] sm:$0xff]
    %v134 = vld [vmem:[#allocation5 + $0x140] sm:$0xff]
    %v135 = vld [vmem:[#allocation5 + $0x148] sm:$0xff]
    %v136 = vld [vmem:[#allocation5 + $0x150] sm:$0xff]
    %v137 = vld [vmem:[#allocation5 + $0x158] sm:$0xff]
    %v138 = vld [vmem:[#allocation5 + $0x160] sm:$0xff]
    %v139 = vld [vmem:[#allocation5 + $0x168] sm:$0xff]
    %v140 = vld [vmem:[#allocation5 + $0x170] sm:$0xff]
    %v141 = vld [vmem:[#allocation5 + $0x178] sm:$0xff]
    %v142 = vld [vmem:[#allocation5 + $0x180] sm:$0xff]
    %v143 = vld [vmem:[#allocation5 + $0x188] sm:$0xff]
    %v144 = vld [vmem:[#allocation5 + $0x190] sm:$0xff]
    %v145 = vld [vmem:[#allocation5 + $0x198] sm:$0xff]
    %v146 = vld [vmem:[#allocation5 + $0x1a0] sm:$0xff]
    %v147 = vld [vmem:[#allocation5 + $0x1a8] sm:$0xff]
    %v148 = vld [vmem:[#allocation5 + $0x1b0] sm:$0xff]
    %v149 = vld [vmem:[#allocation5 + $0x1b8] sm:$0xff]
    %v150 = vld [vmem:[#allocation5 + $0x1c0] sm:$0xff]
    %v151 = vld [vmem:[#allocation5 + $0x1c8] sm:$0xff]
    %v152 = vld [vmem:[#allocation5 + $0x1d0] sm:$0xff]
    %v153 = vld [vmem:[#allocation5 + $0x1d8] sm:$0xff]
    %v154 = vld [vmem:[#allocation5 + $0x1e0] sm:$0xff]
    %v155 = vld [vmem:[#allocation5 + $0x1e8] sm:$0xff]
    %v156 = vld [vmem:[#allocation5 + $0x1f0] sm:$0xff]
    %v157 = vld [vmem:[#allocation5 + $0x1f8] sm:$0xff]
    %v158 = vld [vmem:[#allocation7] sm:$0xff]
    %v160 = vlaneseq
    %v161 = vshrl.u32 %v160, 7
    %v162 = vsub.s32 0, %v161
    %v163 = vrot.slane %v158, %v162
    %v164 = vlaneseq
    %v165 = vshrl.u32 %v164, 7
    %v166 = vsub.s32 1, %v165
    %v167 = vrot.slane %v158, %v166
    %v168 = vlaneseq
    %v169 = vshrl.u32 %v168, 7
    %v170 = vsub.s32 2, %v169
    %v171 = vrot.slane %v158, %v170
    %v172 = vlaneseq
    %v173 = vshrl.u32 %v172, 7
    %v174 = vsub.s32 3, %v173
    %v175 = vrot.slane %v158, %v174
    %v176 = vlaneseq
    %v177 = vshrl.u32 %v176, 7
    %v178 = vsub.s32 4, %v177
    %v179 = vrot.slane %v158, %v178
    %v180 = vlaneseq
    %v181 = vshrl.u32 %v180, 7
    %v182 = vsub.s32 5, %v181
    %v183 = vrot.slane %v158, %v182
    %v184 = vlaneseq
    %v185 = vshrl.u32 %v184, 7
    %v186 = vsub.s32 6, %v185
    %v187 = vrot.slane %v158, %v186
    %v188 = vlaneseq
    %v189 = vshrl.u32 %v188, 7
    %v190 = vsub.s32 7, %v189
    %v191 = vrot.slane %v158, %v190
    %v264 = vunpack.c.l.b16 %v94
    %v265 = vunpack.c.h.b16 %v94
    %v266 = vunpack.c.l.b16 %v95
    %v267 = vunpack.c.h.b16 %v95
    %v268 = vunpack.c.l.b16 %v96
    %v269 = vunpack.c.h.b16 %v96
    %v270 = vunpack.c.l.b16 %v97
    %v271 = vunpack.c.h.b16 %v97
    %v272 = vunpack.c.l.b16 %v98
    %v273 = vunpack.c.h.b16 %v98
    %v274 = vunpack.c.l.b16 %v99
    %v275 = vunpack.c.h.b16 %v99
    %v276 = vunpack.c.l.b16 %v100
    %v277 = vunpack.c.h.b16 %v100
    %v278 = vunpack.c.l.b16 %v101
    %v279 = vunpack.c.h.b16 %v101
    %v280 = vunpack.c.l.b16 %v102
    %v281 = vunpack.c.h.b16 %v102
    %v282 = vunpack.c.l.b16 %v103
    %v283 = vunpack.c.h.b16 %v103
    %v284 = vunpack.c.l.b16 %v104
    %v285 = vunpack.c.h.b16 %v104
    %v286 = vunpack.c.l.b16 %v105
    %v287 = vunpack.c.h.b16 %v105
    %v288 = vunpack.c.l.b16 %v106
    %v289 = vunpack.c.h.b16 %v106
    %v290 = vunpack.c.l.b16 %v107
    %v291 = vunpack.c.h.b16 %v107
    %v292 = vunpack.c.l.b16 %v108
    %v293 = vunpack.c.h.b16 %v108
    %v294 = vunpack.c.l.b16 %v109
    %v295 = vunpack.c.h.b16 %v109
    %v296 = vunpack.c.l.b16 %v110
    %v297 = vunpack.c.h.b16 %v110
    %v298 = vunpack.c.l.b16 %v111
    %v299 = vunpack.c.h.b16 %v111
    %v300 = vunpack.c.l.b16 %v112
    %v301 = vunpack.c.h.b16 %v112
    %v302 = vunpack.c.l.b16 %v113
    %v303 = vunpack.c.h.b16 %v113
    %v304 = vunpack.c.l.b16 %v114
    %v305 = vunpack.c.h.b16 %v114
    %v306 = vunpack.c.l.b16 %v115
    %v307 = vunpack.c.h.b16 %v115
    %v308 = vunpack.c.l.b16 %v116
    %v309 = vunpack.c.h.b16 %v116
    %v310 = vunpack.c.l.b16 %v117
    %v311 = vunpack.c.h.b16 %v117
    %v312 = vunpack.c.l.b16 %v118
    %v313 = vunpack.c.h.b16 %v118
    %v314 = vunpack.c.l.b16 %v119
    %v315 = vunpack.c.h.b16 %v119
    %v316 = vunpack.c.l.b16 %v120
    %v317 = vunpack.c.h.b16 %v120
    %v318 = vunpack.c.l.b16 %v121
    %v319 = vunpack.c.h.b16 %v121
    %v320 = vunpack.c.l.b16 %v122
    %v321 = vunpack.c.h.b16 %v122
    %v322 = vunpack.c.l.b16 %v123
    %v323 = vunpack.c.h.b16 %v123
    %v324 = vunpack.c.l.b16 %v124
    %v325 = vunpack.c.h.b16 %v124
    %v326 = vunpack.c.l.b16 %v125
    %v327 = vunpack.c.h.b16 %v125
    %v328 = vunpack.c.l.b16 %v126
    %v329 = vunpack.c.h.b16 %v126
    %v330 = vunpack.c.l.b16 %v127
    %v331 = vunpack.c.h.b16 %v127
    %v332 = vunpack.c.l.b16 %v128
    %v333 = vunpack.c.h.b16 %v128
    %v334 = vunpack.c.l.b16 %v129
    %v335 = vunpack.c.h.b16 %v129
    %v336 = vunpack.c.l.b16 %v130
    %v337 = vunpack.c.h.b16 %v130
    %v338 = vunpack.c.l.b16 %v131
    %v339 = vunpack.c.h.b16 %v131
    %v340 = vunpack.c.l.b16 %v132
    %v341 = vunpack.c.h.b16 %v132
    %v342 = vunpack.c.l.b16 %v133
    %v343 = vunpack.c.h.b16 %v133
    %v344 = vunpack.c.l.b16 %v134
    %v345 = vunpack.c.h.b16 %v134
    %v346 = vunpack.c.l.b16 %v135
    %v347 = vunpack.c.h.b16 %v135
    %v348 = vunpack.c.l.b16 %v136
    %v349 = vunpack.c.h.b16 %v136
    %v350 = vunpack.c.l.b16 %v137
    %v351 = vunpack.c.h.b16 %v137
    %v352 = vunpack.c.l.b16 %v138
    %v353 = vunpack.c.h.b16 %v138
    %v354 = vunpack.c.l.b16 %v139
    %v355 = vunpack.c.h.b16 %v139
    %v356 = vunpack.c.l.b16 %v140
    %v357 = vunpack.c.h.b16 %v140
    %v358 = vunpack.c.l.b16 %v141
    %v359 = vunpack.c.h.b16 %v141
    %v360 = vunpack.c.l.b16 %v142
    %v361 = vunpack.c.h.b16 %v142
    %v362 = vunpack.c.l.b16 %v143
    %v363 = vunpack.c.h.b16 %v143
    %v364 = vunpack.c.l.b16 %v144
    %v365 = vunpack.c.h.b16 %v144
    %v366 = vunpack.c.l.b16 %v145
    %v367 = vunpack.c.h.b16 %v145
    %v368 = vunpack.c.l.b16 %v146
    %v369 = vunpack.c.h.b16 %v146
    %v370 = vunpack.c.l.b16 %v147
    %v371 = vunpack.c.h.b16 %v147
    %v372 = vunpack.c.l.b16 %v148
    %v373 = vunpack.c.h.b16 %v148
    %v374 = vunpack.c.l.b16 %v149
    %v375 = vunpack.c.h.b16 %v149
    %v376 = vunpack.c.l.b16 %v150
    %v377 = vunpack.c.h.b16 %v150
    %v378 = vunpack.c.l.b16 %v151
    %v379 = vunpack.c.h.b16 %v151
    %v380 = vunpack.c.l.b16 %v152
    %v381 = vunpack.c.h.b16 %v152
    %v382 = vunpack.c.l.b16 %v153
    %v383 = vunpack.c.h.b16 %v153
    %v384 = vunpack.c.l.b16 %v154
    %v385 = vunpack.c.h.b16 %v154
    %v386 = vunpack.c.l.b16 %v155
    %v387 = vunpack.c.h.b16 %v155
    %v388 = vunpack.c.l.b16 %v156
    %v389 = vunpack.c.h.b16 %v156
    %v390 = vunpack.c.l.b16 %v157
    %v391 = vunpack.c.h.b16 %v157
    %v392 = vpack.c.b16 %v272, %v264
    %v393 = vpack.c.b16 %v273, %v265
    %v394 = vpack.c.b16 %v274, %v266
    %v395 = vpack.c.b16 %v275, %v267
    %v396 = vpack.c.b16 %v276, %v268
    %v397 = vpack.c.b16 %v277, %v269
    %v398 = vpack.c.b16 %v278, %v270
    %v399 = vpack.c.b16 %v279, %v271
    %v400 = vpack.c.b16 %v288, %v280
    %v401 = vpack.c.b16 %v289, %v281
    %v402 = vpack.c.b16 %v290, %v282
    %v403 = vpack.c.b16 %v291, %v283
    %v404 = vpack.c.b16 %v292, %v284
    %v405 = vpack.c.b16 %v293, %v285
    %v406 = vpack.c.b16 %v294, %v286
    %v407 = vpack.c.b16 %v295, %v287
    %v408 = vpack.c.b16 %v304, %v296
    %v409 = vpack.c.b16 %v305, %v297
    %v410 = vpack.c.b16 %v306, %v298
    %v411 = vpack.c.b16 %v307, %v299
    %v412 = vpack.c.b16 %v308, %v300
    %v413 = vpack.c.b16 %v309, %v301
    %v414 = vpack.c.b16 %v310, %v302
    %v415 = vpack.c.b16 %v311, %v303
    %v416 = vpack.c.b16 %v320, %v312
    %v417 = vpack.c.b16 %v321, %v313
    %v418 = vpack.c.b16 %v322, %v314
    %v419 = vpack.c.b16 %v323, %v315
    %v420 = vpack.c.b16 %v324, %v316
    %v421 = vpack.c.b16 %v325, %v317
    %v422 = vpack.c.b16 %v326, %v318
    %v423 = vpack.c.b16 %v327, %v319
    %v424 = vpack.c.b16 %v336, %v328
    %v425 = vpack.c.b16 %v337, %v329
    %v426 = vpack.c.b16 %v338, %v330
    %v427 = vpack.c.b16 %v339, %v331
    %v428 = vpack.c.b16 %v340, %v332
    %v429 = vpack.c.b16 %v341, %v333
    %v430 = vpack.c.b16 %v342, %v334
    %v431 = vpack.c.b16 %v343, %v335
    %v432 = vpack.c.b16 %v352, %v344
    %v433 = vpack.c.b16 %v353, %v345
    %v434 = vpack.c.b16 %v354, %v346
    %v435 = vpack.c.b16 %v355, %v347
    %v436 = vpack.c.b16 %v356, %v348
    %v437 = vpack.c.b16 %v357, %v349
    %v438 = vpack.c.b16 %v358, %v350
    %v439 = vpack.c.b16 %v359, %v351
    %v440 = vpack.c.b16 %v368, %v360
    %v441 = vpack.c.b16 %v369, %v361
    %v442 = vpack.c.b16 %v370, %v362
    %v443 = vpack.c.b16 %v371, %v363
    %v444 = vpack.c.b16 %v372, %v364
    %v445 = vpack.c.b16 %v373, %v365
    %v446 = vpack.c.b16 %v374, %v366
    %v447 = vpack.c.b16 %v375, %v367
    %v448 = vpack.c.b16 %v384, %v376
    %v449 = vpack.c.b16 %v385, %v377
    %v450 = vpack.c.b16 %v386, %v378
    %v451 = vpack.c.b16 %v387, %v379
    %v452 = vpack.c.b16 %v388, %v380
    %v453 = vpack.c.b16 %v389, %v381
    %v454 = vpack.c.b16 %v390, %v382
    %v455 = vpack.c.b16 %v391, %v383
    %520 = vmatprep.subr.bf16.mxu0 %v393
    %521 = vmatpush1.bf16.msra.mxu0 %v392
    %522 = vmatprep.subr.bf16.mxu0 %v401
    %523 = vmatpush1.bf16.msra.mxu0 %v400
    %524 = vmatprep.subr.bf16.mxu0 %v409
    %525 = vmatpush1.bf16.msra.mxu0 %v408
    %526 = vmatprep.subr.bf16.mxu0 %v417
    %527 = vmatpush1.bf16.msra.mxu0 %v416
    %528 = vmatprep.subr.bf16.mxu0 %v425
    %529 = vmatpush1.bf16.msra.mxu0 %v424
    %530 = vmatprep.subr.bf16.mxu0 %v433
    %531 = vmatpush1.bf16.msra.mxu0 %v432
    %532 = vmatprep.subr.bf16.mxu0 %v441
    %533 = vmatpush1.bf16.msra.mxu0 %v440
    %534 = vmatprep.subr.bf16.mxu0 %v449
    %535 = vmatpush1.bf16.msra.mxu0 %v448
    %536 = vmatprep.subr.bf16.mxu0 0
    %537 = vmatpush1.bf16.msra.mxu0 0
    %538 = vmatprep.subr.bf16.mxu0 0
    %539 = vmatpush1.bf16.msra.mxu0 0
    %540 = vmatprep.subr.bf16.mxu0 0
    %541 = vmatpush1.bf16.msra.mxu0 0
    %542 = vmatprep.subr.bf16.mxu0 0
    %543 = vmatpush1.bf16.msra.mxu0 0
    %544 = vmatprep.subr.bf16.mxu0 0
    %545 = vmatpush1.bf16.msra.mxu0 0
    %546 = vmatprep.subr.bf16.mxu0 0
    %547 = vmatpush1.bf16.msra.mxu0 0
    %548 = vmatprep.subr.bf16.mxu0 0
    %549 = vmatpush1.bf16.msra.mxu0 0
    %550 = vmatprep.subr.bf16.mxu0 0
    %551 = vmatpush1.bf16.msra.mxu0 0
    %552 = vmatprep.mubr.bf16.mxu0 0
    %553 = vmatmul.mubr.bf16.gmra.mrb[0].mxu0 %v93
    %v554 = vpop.f32.mrb[0].mxu0
    %v555 = vadd.f32 %v163, %v554
    %v556 = vpop.f32.mrb[0].mxu0
    %v557 = vadd.f32 %v167, %v556
    %v558 = vpop.f32.mrb[0].mxu0
    %v559 = vpop.f32.mrb[0].mxu0
    %560 = vdwg.mxu0
    %561 = vmatprep.subr.bf16.mxu0 %v395
    %562 = vmatpush1.bf16.msra.mxu0 %v394
    %563 = vmatprep.subr.bf16.mxu0 %v403
    %564 = vmatpush1.bf16.msra.mxu0 %v402
    %565 = vmatprep.subr.bf16.mxu0 %v411
    %566 = vmatpush1.bf16.msra.mxu0 %v410
    %567 = vmatprep.subr.bf16.mxu0 %v419
    %568 = vmatpush1.bf16.msra.mxu0 %v418
    %569 = vmatprep.subr.bf16.mxu0 %v427
    %570 = vmatpush1.bf16.msra.mxu0 %v426
    %571 = vmatprep.subr.bf16.mxu0 %v435
    %572 = vmatpush1.bf16.msra.mxu0 %v434
    %573 = vmatprep.subr.bf16.mxu0 %v443
    %574 = vmatpush1.bf16.msra.mxu0 %v442
    %575 = vmatprep.subr.bf16.mxu0 %v451
    %576 = vmatpush1.bf16.msra.mxu0 %v450
    %577 = vmatprep.subr.bf16.mxu0 0
    %578 = vmatpush1.bf16.msra.mxu0 0
    %579 = vmatprep.subr.bf16.mxu0 0
    %580 = vmatpush1.bf16.msra.mxu0 0
    %581 = vmatprep.subr.bf16.mxu0 0
    %582 = vmatpush1.bf16.msra.mxu0 0
    %583 = vmatprep.subr.bf16.mxu0 0
    %584 = vmatpush1.bf16.msra.mxu0 0
    %585 = vmatprep.subr.bf16.mxu0 0
    %586 = vmatpush1.bf16.msra.mxu0 0
    %587 = vmatprep.subr.bf16.mxu0 0
    %588 = vmatpush1.bf16.msra.mxu0 0
    %589 = vmatprep.subr.bf16.mxu0 0
    %590 = vmatpush1.bf16.msra.mxu0 0
    %591 = vmatprep.subr.bf16.mxu0 0
    %592 = vmatpush1.bf16.msra.mxu0 0
    %593 = vmatprep.mubr.bf16.mxu0 0
    %594 = vmatmul.mubr.bf16.gmra.mrb[0].mxu0 %v93
    %v595 = vpop.f32.mrb[0].mxu0
    %v596 = vadd.f32 %v171, %v595
    %v597 = vpop.f32.mrb[0].mxu0
    %v598 = vadd.f32 %v175, %v597
    %v599 = vpop.f32.mrb[0].mxu0
    %v600 = vpop.f32.mrb[0].mxu0
    %601 = vdwg.mxu0
    %602 = vmatprep.subr.bf16.mxu0 %v397
    %603 = vmatpush1.bf16.msra.mxu0 %v396
    %604 = vmatprep.subr.bf16.mxu0 %v405
    %605 = vmatpush1.bf16.msra.mxu0 %v404
    %606 = vmatprep.subr.bf16.mxu0 %v413
    %607 = vmatpush1.bf16.msra.mxu0 %v412
    %608 = vmatprep.subr.bf16.mxu0 %v421
    %609 = vmatpush1.bf16.msra.mxu0 %v420
    %610 = vmatprep.subr.bf16.mxu0 %v429
    %611 = vmatpush1.bf16.msra.mxu0 %v428
    %612 = vmatprep.subr.bf16.mxu0 %v437
    %613 = vmatpush1.bf16.msra.mxu0 %v436
    %614 = vmatprep.subr.bf16.mxu0 %v445
    %615 = vmatpush1.bf16.msra.mxu0 %v444
    %616 = vmatprep.subr.bf16.mxu0 %v453
    %617 = vmatpush1.bf16.msra.mxu0 %v452
    %618 = vmatprep.subr.bf16.mxu0 0
    %619 = vmatpush1.bf16.msra.mxu0 0
    %620 = vmatprep.subr.bf16.mxu0 0
    %621 = vmatpush1.bf16.msra.mxu0 0
    %622 = vmatprep.subr.bf16.mxu0 0
    %623 = vmatpush1.bf16.msra.mxu0 0
    %624 = vmatprep.subr.bf16.mxu0 0
    %625 = vmatpush1.bf16.msra.mxu0 0
    %626 = vmatprep.subr.bf16.mxu0 0
    %627 = vmatpush1.bf16.msra.mxu0 0
    %628 = vmatprep.subr.bf16.mxu0 0
    %629 = vmatpush1.bf16.msra.mxu0 0
    %630 = vmatprep.subr.bf16.mxu0 0
    %631 = vmatpush1.bf16.msra.mxu0 0
    %632 = vmatprep.subr.bf16.mxu0 0
    %633 = vmatpush1.bf16.msra.mxu0 0
    %634 = vmatprep.mubr.bf16.mxu0 0
    %635 = vmatmul.mubr.bf16.gmra.mrb[0].mxu0 %v93
    %v636 = vpop.f32.mrb[0].mxu0
    %v637 = vadd.f32 %v179, %v636
    %v638 = vpop.f32.mrb[0].mxu0
    %v639 = vadd.f32 %v183, %v638
    %v640 = vpop.f32.mrb[0].mxu0
    %v641 = vpop.f32.mrb[0].mxu0
    %642 = vdwg.mxu0
    %643 = vmatprep.subr.bf16.mxu0 %v399
    %644 = vmatpush1.bf16.msra.mxu0 %v398
    %645 = vmatprep.subr.bf16.mxu0 %v407
    %646 = vmatpush1.bf16.msra.mxu0 %v406
    %647 = vmatprep.subr.bf16.mxu0 %v415
    %648 = vmatpush1.bf16.msra.mxu0 %v414
    %649 = vmatprep.subr.bf16.mxu0 %v423
    %650 = vmatpush1.bf16.msra.mxu0 %v422
    %651 = vmatprep.subr.bf16.mxu0 %v431
    %652 = vmatpush1.bf16.msra.mxu0 %v430
    %653 = vmatprep.subr.bf16.mxu0 %v439
    %654 = vmatpush1.bf16.msra.mxu0 %v438
    %655 = vmatprep.subr.bf16.mxu0 %v447
    %656 = vmatpush1.bf16.msra.mxu0 %v446
    %657 = vmatprep.subr.bf16.mxu0 %v455
    %658 = vmatpush1.bf16.msra.mxu0 %v454
    %659 = vmatprep.subr.bf16.mxu0 0
    %660 = vmatpush1.bf16.msra.mxu0 0
    %661 = vmatprep.subr.bf16.mxu0 0
    %662 = vmatpush1.bf16.msra.mxu0 0
    %663 = vmatprep.subr.bf16.mxu0 0
    %664 = vmatpush1.bf16.msra.mxu0 0
    %665 = vmatprep.subr.bf16.mxu0 0
    %666 = vmatpush1.bf16.msra.mxu0 0
    %667 = vmatprep.subr.bf16.mxu0 0
    %668 = vmatpush1.bf16.msra.mxu0 0
    %669 = vmatprep.subr.bf16.mxu0 0
    %670 = vmatpush1.bf16.msra.mxu0 0
    %671 = vmatprep.subr.bf16.mxu0 0
    %672 = vmatpush1.bf16.msra.mxu0 0
    %673 = vmatprep.subr.bf16.mxu0 0
    %674 = vmatpush1.bf16.msra.mxu0 0
    %675 = vmatprep.mubr.bf16.mxu0 0
    %676 = vmatmul.mubr.bf16.gmra.mrb[0].mxu0 %v93
    %v677 = vpop.f32.mrb[0].mxu0
    %v678 = vadd.f32 %v187, %v677
    %v679 = vpop.f32.mrb[0].mxu0
    %v680 = vadd.f32 %v191, %v679
    %v681 = vpop.f32.mrb[0].mxu0
    %v682 = vpop.f32.mrb[0].mxu0
    %683 = vdwg.mxu0
    %v684 = vmax.f32 %v555, 0.0
    %v685 = vmax.f32 %v557, 0.0
    %v686 = vmax.f32 %v596, 0.0
    %v687 = vmax.f32 %v598, 0.0
    %v688 = vmax.f32 %v637, 0.0
    %v689 = vmax.f32 %v639, 0.0
    %v690 = vmax.f32 %v678, 0.0
    %v691 = vmax.f32 %v680, 0.0
    %v692 = vpack.c.bf16 %v684, %v684
    %v693 = vpack.c.bf16 %v685, %v685
    %v694 = vpack.c.bf16 %v686, %v686
    %v695 = vpack.c.bf16 %v687, %v687
    %v696 = vpack.c.bf16 %v688, %v688
    %v697 = vpack.c.bf16 %v689, %v689
    %v698 = vpack.c.bf16 %v690, %v690
    %v699 = vpack.c.bf16 %v691, %v691
    %v700 = vld [vmem:[#allocation8] sm:$0xff]
    %v701 = vld [vmem:[#allocation8 + $0x8] sm:$0xff]
    %v702 = vld [vmem:[#allocation8 + $0x10] sm:$0xff]
    %v703 = vld [vmem:[#allocation8 + $0x18] sm:$0xff]
    %v704 = vld [vmem:[#allocation8 + $0x20] sm:$0xff]
    %v705 = vld [vmem:[#allocation8 + $0x28] sm:$0xff]
    %v706 = vld [vmem:[#allocation8 + $0x30] sm:$0xff]
    %v707 = vld [vmem:[#allocation8 + $0x38] sm:$0xff]
    %v708 = vld [vmem:[#allocation8 + $0x40] sm:$0xff]
    %v709 = vld [vmem:[#allocation8 + $0x48] sm:$0xff]
    %v710 = vld [vmem:[#allocation8 + $0x50] sm:$0xff]
    %v711 = vld [vmem:[#allocation8 + $0x58] sm:$0xff]
    %v712 = vld [vmem:[#allocation8 + $0x60] sm:$0xff]
    %v713 = vld [vmem:[#allocation8 + $0x68] sm:$0xff]
    %v714 = vld [vmem:[#allocation8 + $0x70] sm:$0xff]
    %v715 = vld [vmem:[#allocation8 + $0x78] sm:$0xff]
    %v716 = vld [vmem:[#allocation8 + $0x80] sm:$0xff]
    %v717 = vld [vmem:[#allocation8 + $0x88] sm:$0xff]
    %v718 = vld [vmem:[#allocation8 + $0x90] sm:$0xff]
    %v719 = vld [vmem:[#allocation8 + $0x98] sm:$0xff]
    %v720 = vld [vmem:[#allocation8 + $0xa0] sm:$0xff]
    %v721 = vld [vmem:[#allocation8 + $0xa8] sm:$0xff]
    %v722 = vld [vmem:[#allocation8 + $0xb0] sm:$0xff]
    %v723 = vld [vmem:[#allocation8 + $0xb8] sm:$0xff]
    %v724 = vld [vmem:[#allocation8 + $0xc0] sm:$0xff]
    %v725 = vld [vmem:[#allocation8 + $0xc8] sm:$0xff]
    %v726 = vld [vmem:[#allocation8 + $0xd0] sm:$0xff]
    %v727 = vld [vmem:[#allocation8 + $0xd8] sm:$0xff]
    %v728 = vld [vmem:[#allocation8 + $0xe0] sm:$0xff]
    %v729 = vld [vmem:[#allocation8 + $0xe8] sm:$0xff]
    %v730 = vld [vmem:[#allocation8 + $0xf0] sm:$0xff]
    %v731 = vld [vmem:[#allocation8 + $0xf8] sm:$0xff]
    %v732 = vld [vmem:[#allocation8 + $0x100] sm:$0xff]
    %v733 = vld [vmem:[#allocation8 + $0x108] sm:$0xff]
    %v734 = vld [vmem:[#allocation8 + $0x110] sm:$0xff]
    %v735 = vld [vmem:[#allocation8 + $0x118] sm:$0xff]
    %v736 = vld [vmem:[#allocation8 + $0x120] sm:$0xff]
    %v737 = vld [vmem:[#allocation8 + $0x128] sm:$0xff]
    %v738 = vld [vmem:[#allocation8 + $0x130] sm:$0xff]
    %v739 = vld [vmem:[#allocation8 + $0x138] sm:$0xff]
    %v740 = vld [vmem:[#allocation8 + $0x140] sm:$0xff]
    %v741 = vld [vmem:[#allocation8 + $0x148] sm:$0xff]
    %v742 = vld [vmem:[#allocation8 + $0x150] sm:$0xff]
    %v743 = vld [vmem:[#allocation8 + $0x158] sm:$0xff]
    %v744 = vld [vmem:[#allocation8 + $0x160] sm:$0xff]
    %v745 = vld [vmem:[#allocation8 + $0x168] sm:$0xff]
    %v746 = vld [vmem:[#allocation8 + $0x170] sm:$0xff]
    %v747 = vld [vmem:[#allocation8 + $0x178] sm:$0xff]
    %v748 = vld [vmem:[#allocation8 + $0x180] sm:$0xff]
    %v749 = vld [vmem:[#allocation8 + $0x188] sm:$0xff]
    %v750 = vld [vmem:[#allocation8 + $0x190] sm:$0xff]
    %v751 = vld [vmem:[#allocation8 + $0x198] sm:$0xff]
    %v752 = vld [vmem:[#allocation8 + $0x1a0] sm:$0xff]
    %v753 = vld [vmem:[#allocation8 + $0x1a8] sm:$0xff]
    %v754 = vld [vmem:[#allocation8 + $0x1b0] sm:$0xff]
    %v755 = vld [vmem:[#allocation8 + $0x1b8] sm:$0xff]
    %v756 = vld [vmem:[#allocation8 + $0x1c0] sm:$0xff]
    %v757 = vld [vmem:[#allocation8 + $0x1c8] sm:$0xff]
    %v758 = vld [vmem:[#allocation8 + $0x1d0] sm:$0xff]
    %v759 = vld [vmem:[#allocation8 + $0x1d8] sm:$0xff]
    %v760 = vld [vmem:[#allocation8 + $0x1e0] sm:$0xff]
    %v761 = vld [vmem:[#allocation8 + $0x1e8] sm:$0xff]
    %v762 = vld [vmem:[#allocation8 + $0x1f0] sm:$0xff]
    %v763 = vld [vmem:[#allocation8 + $0x1f8] sm:$0xff]
    %v764 = vld [vmem:[#allocation8 + $0x200] sm:$0xff]
    %v765 = vld [vmem:[#allocation8 + $0x208] sm:$0xff]
    %v766 = vld [vmem:[#allocation8 + $0x210] sm:$0xff]
    %v767 = vld [vmem:[#allocation8 + $0x218] sm:$0xff]
    %v768 = vld [vmem:[#allocation8 + $0x220] sm:$0xff]
    %v769 = vld [vmem:[#allocation8 + $0x228] sm:$0xff]
    %v770 = vld [vmem:[#allocation8 + $0x230] sm:$0xff]
    %v771 = vld [vmem:[#allocation8 + $0x238] sm:$0xff]
    %v772 = vld [vmem:[#allocation8 + $0x240] sm:$0xff]
    %v773 = vld [vmem:[#allocation8 + $0x248] sm:$0xff]
    %v774 = vld [vmem:[#allocation8 + $0x250] sm:$0xff]
    %v775 = vld [vmem:[#allocation8 + $0x258] sm:$0xff]
    %v776 = vld [vmem:[#allocation8 + $0x260] sm:$0xff]
    %v777 = vld [vmem:[#allocation8 + $0x268] sm:$0xff]
    %v778 = vld [vmem:[#allocation8 + $0x270] sm:$0xff]
    %v779 = vld [vmem:[#allocation8 + $0x278] sm:$0xff]
    %v780 = vld [vmem:[#allocation8 + $0x280] sm:$0xff]
    %v781 = vld [vmem:[#allocation8 + $0x288] sm:$0xff]
    %v782 = vld [vmem:[#allocation8 + $0x290] sm:$0xff]
    %v783 = vld [vmem:[#allocation8 + $0x298] sm:$0xff]
    %v784 = vld [vmem:[#allocation8 + $0x2a0] sm:$0xff]
    %v785 = vld [vmem:[#allocation8 + $0x2a8] sm:$0xff]
    %v786 = vld [vmem:[#allocation8 + $0x2b0] sm:$0xff]
    %v787 = vld [vmem:[#allocation8 + $0x2b8] sm:$0xff]
    %v788 = vld [vmem:[#allocation8 + $0x2c0] sm:$0xff]
    %v789 = vld [vmem:[#allocation8 + $0x2c8] sm:$0xff]
    %v790 = vld [vmem:[#allocation8 + $0x2d0] sm:$0xff]
    %v791 = vld [vmem:[#allocation8 + $0x2d8] sm:$0xff]
    %v792 = vld [vmem:[#allocation8 + $0x2e0] sm:$0xff]
    %v793 = vld [vmem:[#allocation8 + $0x2e8] sm:$0xff]
    %v794 = vld [vmem:[#allocation8 + $0x2f0] sm:$0xff]
    %v795 = vld [vmem:[#allocation8 + $0x2f8] sm:$0xff]
    %v796 = vld [vmem:[#allocation8 + $0x300] sm:$0xff]
    %v797 = vld [vmem:[#allocation8 + $0x308] sm:$0xff]
    %v798 = vld [vmem:[#allocation8 + $0x310] sm:$0xff]
    %v799 = vld [vmem:[#allocation8 + $0x318] sm:$0xff]
    %v800 = vld [vmem:[#allocation8 + $0x320] sm:$0xff]
    %v801 = vld [vmem:[#allocation8 + $0x328] sm:$0xff]
    %v802 = vld [vmem:[#allocation8 + $0x330] sm:$0xff]
    %v803 = vld [vmem:[#allocation8 + $0x338] sm:$0xff]
    %v804 = vld [vmem:[#allocation8 + $0x340] sm:$0xff]
    %v805 = vld [vmem:[#allocation8 + $0x348] sm:$0xff]
    %v806 = vld [vmem:[#allocation8 + $0x350] sm:$0xff]
    %v807 = vld [vmem:[#allocation8 + $0x358] sm:$0xff]
    %v808 = vld [vmem:[#allocation8 + $0x360] sm:$0xff]
    %v809 = vld [vmem:[#allocation8 + $0x368] sm:$0xff]
    %v810 = vld [vmem:[#allocation8 + $0x370] sm:$0xff]
    %v811 = vld [vmem:[#allocation8 + $0x378] sm:$0xff]
    %v812 = vld [vmem:[#allocation8 + $0x380] sm:$0xff]
    %v813 = vld [vmem:[#allocation8 + $0x388] sm:$0xff]
    %v814 = vld [vmem:[#allocation8 + $0x390] sm:$0xff]
    %v815 = vld [vmem:[#allocation8 + $0x398] sm:$0xff]
    %v816 = vld [vmem:[#allocation8 + $0x3a0] sm:$0xff]
    %v817 = vld [vmem:[#allocation8 + $0x3a8] sm:$0xff]
    %v818 = vld [vmem:[#allocation8 + $0x3b0] sm:$0xff]
    %v819 = vld [vmem:[#allocation8 + $0x3b8] sm:$0xff]
    %v820 = vld [vmem:[#allocation8 + $0x3c0] sm:$0xff]
    %v821 = vld [vmem:[#allocation8 + $0x3c8] sm:$0xff]
    %v822 = vld [vmem:[#allocation8 + $0x3d0] sm:$0xff]
    %v823 = vld [vmem:[#allocation8 + $0x3d8] sm:$0xff]
    %v824 = vld [vmem:[#allocation8 + $0x3e0] sm:$0xff]
    %v825 = vld [vmem:[#allocation8 + $0x3e8] sm:$0xff]
    %v826 = vld [vmem:[#allocation8 + $0x3f0] sm:$0xff]
    %v827 = vld [vmem:[#allocation8 + $0x3f8] sm:$0xff]
    %v828 = vld [vmem:[#allocation8 + $0x400] sm:$0xff]
    %v829 = vld [vmem:[#allocation8 + $0x408] sm:$0xff]
    %v830 = vld [vmem:[#allocation8 + $0x410] sm:$0xff]
    %v831 = vld [vmem:[#allocation8 + $0x418] sm:$0xff]
    %v832 = vld [vmem:[#allocation8 + $0x420] sm:$0xff]
    %v833 = vld [vmem:[#allocation8 + $0x428] sm:$0xff]
    %v834 = vld [vmem:[#allocation8 + $0x430] sm:$0xff]
    %v835 = vld [vmem:[#allocation8 + $0x438] sm:$0xff]
    %v836 = vld [vmem:[#allocation8 + $0x440] sm:$0xff]
    %v837 = vld [vmem:[#allocation8 + $0x448] sm:$0xff]
    %v838 = vld [vmem:[#allocation8 + $0x450] sm:$0xff]
    %v839 = vld [vmem:[#allocation8 + $0x458] sm:$0xff]
    %v840 = vld [vmem:[#allocation8 + $0x460] sm:$0xff]
    %v841 = vld [vmem:[#allocation8 + $0x468] sm:$0xff]
    %v842 = vld [vmem:[#allocation8 + $0x470] sm:$0xff]
    %v843 = vld [vmem:[#allocation8 + $0x478] sm:$0xff]
    %v844 = vld [vmem:[#allocation8 + $0x480] sm:$0xff]
    %v845 = vld [vmem:[#allocation8 + $0x488] sm:$0xff]
    %v846 = vld [vmem:[#allocation8 + $0x490] sm:$0xff]
    %v847 = vld [vmem:[#allocation8 + $0x498] sm:$0xff]
    %v848 = vld [vmem:[#allocation8 + $0x4a0] sm:$0xff]
    %v849 = vld [vmem:[#allocation8 + $0x4a8] sm:$0xff]
    %v850 = vld [vmem:[#allocation8 + $0x4b0] sm:$0xff]
    %v851 = vld [vmem:[#allocation8 + $0x4b8] sm:$0xff]
    %v852 = vld [vmem:[#allocation8 + $0x4c0] sm:$0xff]
    %v853 = vld [vmem:[#allocation8 + $0x4c8] sm:$0xff]
    %v854 = vld [vmem:[#allocation8 + $0x4d0] sm:$0xff]
    %v855 = vld [vmem:[#allocation8 + $0x4d8] sm:$0xff]
    %v856 = vld [vmem:[#allocation8 + $0x4e0] sm:$0xff]
    %v857 = vld [vmem:[#allocation8 + $0x4e8] sm:$0xff]
    %v858 = vld [vmem:[#allocation8 + $0x4f0] sm:$0xff]
    %v859 = vld [vmem:[#allocation8 + $0x4f8] sm:$0xff]
    %v860 = vld [vmem:[#allocation8 + $0x500] sm:$0xff]
    %v861 = vld [vmem:[#allocation8 + $0x508] sm:$0xff]
    %v862 = vld [vmem:[#allocation8 + $0x510] sm:$0xff]
    %v863 = vld [vmem:[#allocation8 + $0x518] sm:$0xff]
    %v864 = vld [vmem:[#allocation8 + $0x520] sm:$0xff]
    %v865 = vld [vmem:[#allocation8 + $0x528] sm:$0xff]
    %v866 = vld [vmem:[#allocation8 + $0x530] sm:$0xff]
    %v867 = vld [vmem:[#allocation8 + $0x538] sm:$0xff]
    %v868 = vld [vmem:[#allocation8 + $0x540] sm:$0xff]
    %v869 = vld [vmem:[#allocation8 + $0x548] sm:$0xff]
    %v870 = vld [vmem:[#allocation8 + $0x550] sm:$0xff]
    %v871 = vld [vmem:[#allocation8 + $0x558] sm:$0xff]
    %v872 = vld [vmem:[#allocation8 + $0x560] sm:$0xff]
    %v873 = vld [vmem:[#allocation8 + $0x568] sm:$0xff]
    %v874 = vld [vmem:[#allocation8 + $0x570] sm:$0xff]
    %v875 = vld [vmem:[#allocation8 + $0x578] sm:$0xff]
    %v876 = vld [vmem:[#allocation8 + $0x580] sm:$0xff]
    %v877 = vld [vmem:[#allocation8 + $0x588] sm:$0xff]
    %v878 = vld [vmem:[#allocation8 + $0x590] sm:$0xff]
    %v879 = vld [vmem:[#allocation8 + $0x598] sm:$0xff]
    %v880 = vld [vmem:[#allocation8 + $0x5a0] sm:$0xff]
    %v881 = vld [vmem:[#allocation8 + $0x5a8] sm:$0xff]
    %v882 = vld [vmem:[#allocation8 + $0x5b0] sm:$0xff]
    %v883 = vld [vmem:[#allocation8 + $0x5b8] sm:$0xff]
    %v884 = vld [vmem:[#allocation8 + $0x5c0] sm:$0xff]
    %v885 = vld [vmem:[#allocation8 + $0x5c8] sm:$0xff]
    %v886 = vld [vmem:[#allocation8 + $0x5d0] sm:$0xff]
    %v887 = vld [vmem:[#allocation8 + $0x5d8] sm:$0xff]
    %v888 = vld [vmem:[#allocation8 + $0x5e0] sm:$0xff]
    %v889 = vld [vmem:[#allocation8 + $0x5e8] sm:$0xff]
    %v890 = vld [vmem:[#allocation8 + $0x5f0] sm:$0xff]
    %v891 = vld [vmem:[#allocation8 + $0x5f8] sm:$0xff]
    %v892 = vld [vmem:[#allocation8 + $0x600] sm:$0xff]
    %v893 = vld [vmem:[#allocation8 + $0x608] sm:$0xff]
    %v894 = vld [vmem:[#allocation8 + $0x610] sm:$0xff]
    %v895 = vld [vmem:[#allocation8 + $0x618] sm:$0xff]
    %v896 = vld [vmem:[#allocation8 + $0x620] sm:$0xff]
    %v897 = vld [vmem:[#allocation8 + $0x628] sm:$0xff]
    %v898 = vld [vmem:[#allocation8 + $0x630] sm:$0xff]
    %v899 = vld [vmem:[#allocation8 + $0x638] sm:$0xff]
    %v900 = vld [vmem:[#allocation8 + $0x640] sm:$0xff]
    %v901 = vld [vmem:[#allocation8 + $0x648] sm:$0xff]
    %v902 = vld [vmem:[#allocation8 + $0x650] sm:$0xff]
    %v903 = vld [vmem:[#allocation8 + $0x658] sm:$0xff]
    %v904 = vld [vmem:[#allocation8 + $0x660] sm:$0xff]
    %v905 = vld [vmem:[#allocation8 + $0x668] sm:$0xff]
    %v906 = vld [vmem:[#allocation8 + $0x670] sm:$0xff]
    %v907 = vld [vmem:[#allocation8 + $0x678] sm:$0xff]
    %v908 = vld [vmem:[#allocation8 + $0x680] sm:$0xff]
    %v909 = vld [vmem:[#allocation8 + $0x688] sm:$0xff]
    %v910 = vld [vmem:[#allocation8 + $0x690] sm:$0xff]
    %v911 = vld [vmem:[#allocation8 + $0x698] sm:$0xff]
    %v912 = vld [vmem:[#allocation8 + $0x6a0] sm:$0xff]
    %v913 = vld [vmem:[#allocation8 + $0x6a8] sm:$0xff]
    %v914 = vld [vmem:[#allocation8 + $0x6b0] sm:$0xff]
    %v915 = vld [vmem:[#allocation8 + $0x6b8] sm:$0xff]
    %v916 = vld [vmem:[#allocation8 + $0x6c0] sm:$0xff]
    %v917 = vld [vmem:[#allocation8 + $0x6c8] sm:$0xff]
    %v918 = vld [vmem:[#allocation8 + $0x6d0] sm:$0xff]
    %v919 = vld [vmem:[#allocation8 + $0x6d8] sm:$0xff]
    %v920 = vld [vmem:[#allocation8 + $0x6e0] sm:$0xff]
    %v921 = vld [vmem:[#allocation8 + $0x6e8] sm:$0xff]
    %v922 = vld [vmem:[#allocation8 + $0x6f0] sm:$0xff]
    %v923 = vld [vmem:[#allocation8 + $0x6f8] sm:$0xff]
    %v924 = vld [vmem:[#allocation8 + $0x700] sm:$0xff]
    %v925 = vld [vmem:[#allocation8 + $0x708] sm:$0xff]
    %v926 = vld [vmem:[#allocation8 + $0x710] sm:$0xff]
    %v927 = vld [vmem:[#allocation8 + $0x718] sm:$0xff]
    %v928 = vld [vmem:[#allocation8 + $0x720] sm:$0xff]
    %v929 = vld [vmem:[#allocation8 + $0x728] sm:$0xff]
    %v930 = vld [vmem:[#allocation8 + $0x730] sm:$0xff]
    %v931 = vld [vmem:[#allocation8 + $0x738] sm:$0xff]
    %v932 = vld [vmem:[#allocation8 + $0x740] sm:$0xff]
    %v933 = vld [vmem:[#allocation8 + $0x748] sm:$0xff]
    %v934 = vld [vmem:[#allocation8 + $0x750] sm:$0xff]
    %v935 = vld [vmem:[#allocation8 + $0x758] sm:$0xff]
    %v936 = vld [vmem:[#allocation8 + $0x760] sm:$0xff]
    %v937 = vld [vmem:[#allocation8 + $0x768] sm:$0xff]
    %v938 = vld [vmem:[#allocation8 + $0x770] sm:$0xff]
    %v939 = vld [vmem:[#allocation8 + $0x778] sm:$0xff]
    %v940 = vld [vmem:[#allocation8 + $0x780] sm:$0xff]
    %v941 = vld [vmem:[#allocation8 + $0x788] sm:$0xff]
    %v942 = vld [vmem:[#allocation8 + $0x790] sm:$0xff]
    %v943 = vld [vmem:[#allocation8 + $0x798] sm:$0xff]
    %v944 = vld [vmem:[#allocation8 + $0x7a0] sm:$0xff]
    %v945 = vld [vmem:[#allocation8 + $0x7a8] sm:$0xff]
    %v946 = vld [vmem:[#allocation8 + $0x7b0] sm:$0xff]
    %v947 = vld [vmem:[#allocation8 + $0x7b8] sm:$0xff]
    %v948 = vld [vmem:[#allocation8 + $0x7c0] sm:$0xff]
    %v949 = vld [vmem:[#allocation8 + $0x7c8] sm:$0xff]
    %v950 = vld [vmem:[#allocation8 + $0x7d0] sm:$0xff]
    %v951 = vld [vmem:[#allocation8 + $0x7d8] sm:$0xff]
    %v952 = vld [vmem:[#allocation8 + $0x7e0] sm:$0xff]
    %v953 = vld [vmem:[#allocation8 + $0x7e8] sm:$0xff]
    %v954 = vld [vmem:[#allocation8 + $0x7f0] sm:$0xff]
    %v955 = vld [vmem:[#allocation8 + $0x7f8] sm:$0xff]
    %v956 = vld [vmem:[%s4] sm:$0xf]
    %v958 = vlaneseq
    %v959 = vshrl.u32 %v958, 7
    %v960 = vsub.s32 0, %v959
    %v961 = vrot.slane %v956, %v960
    %v962 = vlaneseq
    %v963 = vshrl.u32 %v962, 7
    %v964 = vsub.s32 1, %v963
    %v965 = vrot.slane %v956, %v964
    %v966 = vlaneseq
    %v967 = vshrl.u32 %v966, 7
    %v968 = vsub.s32 2, %v967
    %v969 = vrot.slane %v956, %v968
    %v970 = vlaneseq
    %v971 = vshrl.u32 %v970, 7
    %v972 = vsub.s32 3, %v971
    %v973 = vrot.slane %v956, %v972
    %v1234 = vunpack.c.l.b16 %v700
    %v1235 = vunpack.c.h.b16 %v700
    %v1236 = vunpack.c.l.b16 %v701
    %v1237 = vunpack.c.h.b16 %v701
    %v1238 = vunpack.c.l.b16 %v702
    %v1239 = vunpack.c.h.b16 %v702
    %v1240 = vunpack.c.l.b16 %v703
    %v1241 = vunpack.c.h.b16 %v703
    %v1242 = vunpack.c.l.b16 %v704
    %v1243 = vunpack.c.h.b16 %v704
    %v1244 = vunpack.c.l.b16 %v705
    %v1245 = vunpack.c.h.b16 %v705
    %v1246 = vunpack.c.l.b16 %v706
    %v1247 = vunpack.c.h.b16 %v706
    %v1248 = vunpack.c.l.b16 %v707
    %v1249 = vunpack.c.h.b16 %v707
    %v1250 = vunpack.c.l.b16 %v708
    %v1251 = vunpack.c.h.b16 %v708
    %v1252 = vunpack.c.l.b16 %v709
    %v1253 = vunpack.c.h.b16 %v709
    %v1254 = vunpack.c.l.b16 %v710
    %v1255 = vunpack.c.h.b16 %v710
    %v1256 = vunpack.c.l.b16 %v711
    %v1257 = vunpack.c.h.b16 %v711
    %v1258 = vunpack.c.l.b16 %v712
    %v1259 = vunpack.c.h.b16 %v712
    %v1260 = vunpack.c.l.b16 %v713
    %v1261 = vunpack.c.h.b16 %v713
    %v1262 = vunpack.c.l.b16 %v714
    %v1263 = vunpack.c.h.b16 %v714
    %v1264 = vunpack.c.l.b16 %v715
    %v1265 = vunpack.c.h.b16 %v715
    %v1266 = vunpack.c.l.b16 %v716
    %v1267 = vunpack.c.h.b16 %v716
    %v1268 = vunpack.c.l.b16 %v717
    %v1269 = vunpack.c.h.b16 %v717
    %v1270 = vunpack.c.l.b16 %v718
    %v1271 = vunpack.c.h.b16 %v718
    %v1272 = vunpack.c.l.b16 %v719
    %v1273 = vunpack.c.h.b16 %v719
    %v1274 = vunpack.c.l.b16 %v720
    %v1275 = vunpack.c.h.b16 %v720
    %v1276 = vunpack.c.l.b16 %v721
    %v1277 = vunpack.c.h.b16 %v721
    %v1278 = vunpack.c.l.b16 %v722
    %v1279 = vunpack.c.h.b16 %v722
    %v1280 = vunpack.c.l.b16 %v723
    %v1281 = vunpack.c.h.b16 %v723
    %v1282 = vunpack.c.l.b16 %v724
    %v1283 = vunpack.c.h.b16 %v724
    %v1284 = vunpack.c.l.b16 %v725
    %v1285 = vunpack.c.h.b16 %v725
    %v1286 = vunpack.c.l.b16 %v726
    %v1287 = vunpack.c.h.b16 %v726
    %v1288 = vunpack.c.l.b16 %v727
    %v1289 = vunpack.c.h.b16 %v727
    %v1290 = vunpack.c.l.b16 %v728
    %v1291 = vunpack.c.h.b16 %v728
    %v1292 = vunpack.c.l.b16 %v729
    %v1293 = vunpack.c.h.b16 %v729
    %v1294 = vunpack.c.l.b16 %v730
    %v1295 = vunpack.c.h.b16 %v730
    %v1296 = vunpack.c.l.b16 %v731
    %v1297 = vunpack.c.h.b16 %v731
    %v1298 = vunpack.c.l.b16 %v732
    %v1299 = vunpack.c.h.b16 %v732
    %v1300 = vunpack.c.l.b16 %v733
    %v1301 = vunpack.c.h.b16 %v733
    %v1302 = vunpack.c.l.b16 %v734
    %v1303 = vunpack.c.h.b16 %v734
    %v1304 = vunpack.c.l.b16 %v735
    %v1305 = vunpack.c.h.b16 %v735
    %v1306 = vunpack.c.l.b16 %v736
    %v1307 = vunpack.c.h.b16 %v736
    %v1308 = vunpack.c.l.b16 %v737
    %v1309 = vunpack.c.h.b16 %v737
    %v1310 = vunpack.c.l.b16 %v738
    %v1311 = vunpack.c.h.b16 %v738
    %v1312 = vunpack.c.l.b16 %v739
    %v1313 = vunpack.c.h.b16 %v739
    %v1314 = vunpack.c.l.b16 %v740
    %v1315 = vunpack.c.h.b16 %v740
    %v1316 = vunpack.c.l.b16 %v741
    %v1317 = vunpack.c.h.b16 %v741
    %v1318 = vunpack.c.l.b16 %v742
    %v1319 = vunpack.c.h.b16 %v742
    %v1320 = vunpack.c.l.b16 %v743
    %v1321 = vunpack.c.h.b16 %v743
    %v1322 = vunpack.c.l.b16 %v744
    %v1323 = vunpack.c.h.b16 %v744
    %v1324 = vunpack.c.l.b16 %v745
    %v1325 = vunpack.c.h.b16 %v745
    %v1326 = vunpack.c.l.b16 %v746
    %v1327 = vunpack.c.h.b16 %v746
    %v1328 = vunpack.c.l.b16 %v747
    %v1329 = vunpack.c.h.b16 %v747
    %v1330 = vunpack.c.l.b16 %v748
    %v1331 = vunpack.c.h.b16 %v748
    %v1332 = vunpack.c.l.b16 %v749
    %v1333 = vunpack.c.h.b16 %v749
    %v1334 = vunpack.c.l.b16 %v750
    %v1335 = vunpack.c.h.b16 %v750
    %v1336 = vunpack.c.l.b16 %v751
    %v1337 = vunpack.c.h.b16 %v751
    %v1338 = vunpack.c.l.b16 %v752
    %v1339 = vunpack.c.h.b16 %v752
    %v1340 = vunpack.c.l.b16 %v753
    %v1341 = vunpack.c.h.b16 %v753
    %v1342 = vunpack.c.l.b16 %v754
    %v1343 = vunpack.c.h.b16 %v754
    %v1344 = vunpack.c.l.b16 %v755
    %v1345 = vunpack.c.h.b16 %v755
    %v1346 = vunpack.c.l.b16 %v756
    %v1347 = vunpack.c.h.b16 %v756
    %v1348 = vunpack.c.l.b16 %v757
    %v1349 = vunpack.c.h.b16 %v757
    %v1350 = vunpack.c.l.b16 %v758
    %v1351 = vunpack.c.h.b16 %v758
    %v1352 = vunpack.c.l.b16 %v759
    %v1353 = vunpack.c.h.b16 %v759
    %v1354 = vunpack.c.l.b16 %v760
    %v1355 = vunpack.c.h.b16 %v760
    %v1356 = vunpack.c.l.b16 %v761
    %v1357 = vunpack.c.h.b16 %v761
    %v1358 = vunpack.c.l.b16 %v762
    %v1359 = vunpack.c.h.b16 %v762
    %v1360 = vunpack.c.l.b16 %v763
    %v1361 = vunpack.c.h.b16 %v763
    %v1362 = vunpack.c.l.b16 %v764
    %v1363 = vunpack.c.h.b16 %v764
    %v1364 = vunpack.c.l.b16 %v765
    %v1365 = vunpack.c.h.b16 %v765
    %v1366 = vunpack.c.l.b16 %v766
    %v1367 = vunpack.c.h.b16 %v766
    %v1368 = vunpack.c.l.b16 %v767
    %v1369 = vunpack.c.h.b16 %v767
    %v1370 = vunpack.c.l.b16 %v768
    %v1371 = vunpack.c.h.b16 %v768
    %v1372 = vunpack.c.l.b16 %v769
    %v1373 = vunpack.c.h.b16 %v769
    %v1374 = vunpack.c.l.b16 %v770
    %v1375 = vunpack.c.h.b16 %v770
    %v1376 = vunpack.c.l.b16 %v771
    %v1377 = vunpack.c.h.b16 %v771
    %v1378 = vunpack.c.l.b16 %v772
    %v1379 = vunpack.c.h.b16 %v772
    %v1380 = vunpack.c.l.b16 %v773
    %v1381 = vunpack.c.h.b16 %v773
    %v1382 = vunpack.c.l.b16 %v774
    %v1383 = vunpack.c.h.b16 %v774
    %v1384 = vunpack.c.l.b16 %v775
    %v1385 = vunpack.c.h.b16 %v775
    %v1386 = vunpack.c.l.b16 %v776
    %v1387 = vunpack.c.h.b16 %v776
    %v1388 = vunpack.c.l.b16 %v777
    %v1389 = vunpack.c.h.b16 %v777
    %v1390 = vunpack.c.l.b16 %v778
    %v1391 = vunpack.c.h.b16 %v778
    %v1392 = vunpack.c.l.b16 %v779
    %v1393 = vunpack.c.h.b16 %v779
    %v1394 = vunpack.c.l.b16 %v780
    %v1395 = vunpack.c.h.b16 %v780
    %v1396 = vunpack.c.l.b16 %v781
    %v1397 = vunpack.c.h.b16 %v781
    %v1398 = vunpack.c.l.b16 %v782
    %v1399 = vunpack.c.h.b16 %v782
    %v1400 = vunpack.c.l.b16 %v783
    %v1401 = vunpack.c.h.b16 %v783
    %v1402 = vunpack.c.l.b16 %v784
    %v1403 = vunpack.c.h.b16 %v784
    %v1404 = vunpack.c.l.b16 %v785
    %v1405 = vunpack.c.h.b16 %v785
    %v1406 = vunpack.c.l.b16 %v786
    %v1407 = vunpack.c.h.b16 %v786
    %v1408 = vunpack.c.l.b16 %v787
    %v1409 = vunpack.c.h.b16 %v787
    %v1410 = vunpack.c.l.b16 %v788
    %v1411 = vunpack.c.h.b16 %v788
    %v1412 = vunpack.c.l.b16 %v789
    %v1413 = vunpack.c.h.b16 %v789
    %v1414 = vunpack.c.l.b16 %v790
    %v1415 = vunpack.c.h.b16 %v790
    %v1416 = vunpack.c.l.b16 %v791
    %v1417 = vunpack.c.h.b16 %v791
    %v1418 = vunpack.c.l.b16 %v792
    %v1419 = vunpack.c.h.b16 %v792
    %v1420 = vunpack.c.l.b16 %v793
    %v1421 = vunpack.c.h.b16 %v793
    %v1422 = vunpack.c.l.b16 %v794
    %v1423 = vunpack.c.h.b16 %v794
    %v1424 = vunpack.c.l.b16 %v795
    %v1425 = vunpack.c.h.b16 %v795
    %v1426 = vunpack.c.l.b16 %v796
    %v1427 = vunpack.c.h.b16 %v796
    %v1428 = vunpack.c.l.b16 %v797
    %v1429 = vunpack.c.h.b16 %v797
    %v1430 = vunpack.c.l.b16 %v798
    %v1431 = vunpack.c.h.b16 %v798
    %v1432 = vunpack.c.l.b16 %v799
    %v1433 = vunpack.c.h.b16 %v799
    %v1434 = vunpack.c.l.b16 %v800
    %v1435 = vunpack.c.h.b16 %v800
    %v1436 = vunpack.c.l.b16 %v801
    %v1437 = vunpack.c.h.b16 %v801
    %v1438 = vunpack.c.l.b16 %v802
    %v1439 = vunpack.c.h.b16 %v802
    %v1440 = vunpack.c.l.b16 %v803
    %v1441 = vunpack.c.h.b16 %v803
    %v1442 = vunpack.c.l.b16 %v804
    %v1443 = vunpack.c.h.b16 %v804
    %v1444 = vunpack.c.l.b16 %v805
    %v1445 = vunpack.c.h.b16 %v805
    %v1446 = vunpack.c.l.b16 %v806
    %v1447 = vunpack.c.h.b16 %v806
    %v1448 = vunpack.c.l.b16 %v807
    %v1449 = vunpack.c.h.b16 %v807
    %v1450 = vunpack.c.l.b16 %v808
    %v1451 = vunpack.c.h.b16 %v808
    %v1452 = vunpack.c.l.b16 %v809
    %v1453 = vunpack.c.h.b16 %v809
    %v1454 = vunpack.c.l.b16 %v810
    %v1455 = vunpack.c.h.b16 %v810
    %v1456 = vunpack.c.l.b16 %v811
    %v1457 = vunpack.c.h.b16 %v811
    %v1458 = vunpack.c.l.b16 %v812
    %v1459 = vunpack.c.h.b16 %v812
    %v1460 = vunpack.c.l.b16 %v813
    %v1461 = vunpack.c.h.b16 %v813
    %v1462 = vunpack.c.l.b16 %v814
    %v1463 = vunpack.c.h.b16 %v814
    %v1464 = vunpack.c.l.b16 %v815
    %v1465 = vunpack.c.h.b16 %v815
    %v1466 = vunpack.c.l.b16 %v816
    %v1467 = vunpack.c.h.b16 %v816
    %v1468 = vunpack.c.l.b16 %v817
    %v1469 = vunpack.c.h.b16 %v817
    %v1470 = vunpack.c.l.b16 %v818
    %v1471 = vunpack.c.h.b16 %v818
    %v1472 = vunpack.c.l.b16 %v819
    %v1473 = vunpack.c.h.b16 %v819
    %v1474 = vunpack.c.l.b16 %v820
    %v1475 = vunpack.c.h.b16 %v820
    %v1476 = vunpack.c.l.b16 %v821
    %v1477 = vunpack.c.h.b16 %v821
    %v1478 = vunpack.c.l.b16 %v822
    %v1479 = vunpack.c.h.b16 %v822
    %v1480 = vunpack.c.l.b16 %v823
    %v1481 = vunpack.c.h.b16 %v823
    %v1482 = vunpack.c.l.b16 %v824
    %v1483 = vunpack.c.h.b16 %v824
    %v1484 = vunpack.c.l.b16 %v825
    %v1485 = vunpack.c.h.b16 %v825
    %v1486 = vunpack.c.l.b16 %v826
    %v1487 = vunpack.c.h.b16 %v826
    %v1488 = vunpack.c.l.b16 %v827
    %v1489 = vunpack.c.h.b16 %v827
    %v1490 = vunpack.c.l.b16 %v828
    %v1491 = vunpack.c.h.b16 %v828
    %v1492 = vunpack.c.l.b16 %v829
    %v1493 = vunpack.c.h.b16 %v829
    %v1494 = vunpack.c.l.b16 %v830
    %v1495 = vunpack.c.h.b16 %v830
    %v1496 = vunpack.c.l.b16 %v831
    %v1497 = vunpack.c.h.b16 %v831
    %v1498 = vunpack.c.l.b16 %v832
    %v1499 = vunpack.c.h.b16 %v832
    %v1500 = vunpack.c.l.b16 %v833
    %v1501 = vunpack.c.h.b16 %v833
    %v1502 = vunpack.c.l.b16 %v834
    %v1503 = vunpack.c.h.b16 %v834
    %v1504 = vunpack.c.l.b16 %v835
    %v1505 = vunpack.c.h.b16 %v835
    %v1506 = vunpack.c.l.b16 %v836
    %v1507 = vunpack.c.h.b16 %v836
    %v1508 = vunpack.c.l.b16 %v837
    %v1509 = vunpack.c.h.b16 %v837
    %v1510 = vunpack.c.l.b16 %v838
    %v1511 = vunpack.c.h.b16 %v838
    %v1512 = vunpack.c.l.b16 %v839
    %v1513 = vunpack.c.h.b16 %v839
    %v1514 = vunpack.c.l.b16 %v840
    %v1515 = vunpack.c.h.b16 %v840
    %v1516 = vunpack.c.l.b16 %v841
    %v1517 = vunpack.c.h.b16 %v841
    %v1518 = vunpack.c.l.b16 %v842
    %v1519 = vunpack.c.h.b16 %v842
    %v1520 = vunpack.c.l.b16 %v843
    %v1521 = vunpack.c.h.b16 %v843
    %v1522 = vunpack.c.l.b16 %v844
    %v1523 = vunpack.c.h.b16 %v844
    %v1524 = vunpack.c.l.b16 %v845
    %v1525 = vunpack.c.h.b16 %v845
    %v1526 = vunpack.c.l.b16 %v846
    %v1527 = vunpack.c.h.b16 %v846
    %v1528 = vunpack.c.l.b16 %v847
    %v1529 = vunpack.c.h.b16 %v847
    %v1530 = vunpack.c.l.b16 %v848
    %v1531 = vunpack.c.h.b16 %v848
    %v1532 = vunpack.c.l.b16 %v849
    %v1533 = vunpack.c.h.b16 %v849
    %v1534 = vunpack.c.l.b16 %v850
    %v1535 = vunpack.c.h.b16 %v850
    %v1536 = vunpack.c.l.b16 %v851
    %v1537 = vunpack.c.h.b16 %v851
    %v1538 = vunpack.c.l.b16 %v852
    %v1539 = vunpack.c.h.b16 %v852
    %v1540 = vunpack.c.l.b16 %v853
    %v1541 = vunpack.c.h.b16 %v853
    %v1542 = vunpack.c.l.b16 %v854
    %v1543 = vunpack.c.h.b16 %v854
    %v1544 = vunpack.c.l.b16 %v855
    %v1545 = vunpack.c.h.b16 %v855
    %v1546 = vunpack.c.l.b16 %v856
    %v1547 = vunpack.c.h.b16 %v856
    %v1548 = vunpack.c.l.b16 %v857
    %v1549 = vunpack.c.h.b16 %v857
    %v1550 = vunpack.c.l.b16 %v858
    %v1551 = vunpack.c.h.b16 %v858
    %v1552 = vunpack.c.l.b16 %v859
    %v1553 = vunpack.c.h.b16 %v859
    %v1554 = vunpack.c.l.b16 %v860
    %v1555 = vunpack.c.h.b16 %v860
    %v1556 = vunpack.c.l.b16 %v861
    %v1557 = vunpack.c.h.b16 %v861
    %v1558 = vunpack.c.l.b16 %v862
    %v1559 = vunpack.c.h.b16 %v862
    %v1560 = vunpack.c.l.b16 %v863
    %v1561 = vunpack.c.h.b16 %v863
    %v1562 = vunpack.c.l.b16 %v864
    %v1563 = vunpack.c.h.b16 %v864
    %v1564 = vunpack.c.l.b16 %v865
    %v1565 = vunpack.c.h.b16 %v865
    %v1566 = vunpack.c.l.b16 %v866
    %v1567 = vunpack.c.h.b16 %v866
    %v1568 = vunpack.c.l.b16 %v867
    %v1569 = vunpack.c.h.b16 %v867
    %v1570 = vunpack.c.l.b16 %v868
    %v1571 = vunpack.c.h.b16 %v868
    %v1572 = vunpack.c.l.b16 %v869
    %v1573 = vunpack.c.h.b16 %v869
    %v1574 = vunpack.c.l.b16 %v870
    %v1575 = vunpack.c.h.b16 %v870
    %v1576 = vunpack.c.l.b16 %v871
    %v1577 = vunpack.c.h.b16 %v871
    %v1578 = vunpack.c.l.b16 %v872
    %v1579 = vunpack.c.h.b16 %v872
    %v1580 = vunpack.c.l.b16 %v873
    %v1581 = vunpack.c.h.b16 %v873
    %v1582 = vunpack.c.l.b16 %v874
    %v1583 = vunpack.c.h.b16 %v874
    %v1584 = vunpack.c.l.b16 %v875
    %v1585 = vunpack.c.h.b16 %v875
    %v1586 = vunpack.c.l.b16 %v876
    %v1587 = vunpack.c.h.b16 %v876
    %v1588 = vunpack.c.l.b16 %v877
    %v1589 = vunpack.c.h.b16 %v877
    %v1590 = vunpack.c.l.b16 %v878
    %v1591 = vunpack.c.h.b16 %v878
    %v1592 = vunpack.c.l.b16 %v879
    %v1593 = vunpack.c.h.b16 %v879
    %v1594 = vunpack.c.l.b16 %v880
    %v1595 = vunpack.c.h.b16 %v880
    %v1596 = vunpack.c.l.b16 %v881
    %v1597 = vunpack.c.h.b16 %v881
    %v1598 = vunpack.c.l.b16 %v882
    %v1599 = vunpack.c.h.b16 %v882
    %v1600 = vunpack.c.l.b16 %v883
    %v1601 = vunpack.c.h.b16 %v883
    %v1602 = vunpack.c.l.b16 %v884
    %v1603 = vunpack.c.h.b16 %v884
    %v1604 = vunpack.c.l.b16 %v885
    %v1605 = vunpack.c.h.b16 %v885
    %v1606 = vunpack.c.l.b16 %v886
    %v1607 = vunpack.c.h.b16 %v886
    %v1608 = vunpack.c.l.b16 %v887
    %v1609 = vunpack.c.h.b16 %v887
    %v1610 = vunpack.c.l.b16 %v888
    %v1611 = vunpack.c.h.b16 %v888
    %v1612 = vunpack.c.l.b16 %v889
    %v1613 = vunpack.c.h.b16 %v889
    %v1614 = vunpack.c.l.b16 %v890
    %v1615 = vunpack.c.h.b16 %v890
    %v1616 = vunpack.c.l.b16 %v891
    %v1617 = vunpack.c.h.b16 %v891
    %v1618 = vunpack.c.l.b16 %v892
    %v1619 = vunpack.c.h.b16 %v892
    %v1620 = vunpack.c.l.b16 %v893
    %v1621 = vunpack.c.h.b16 %v893
    %v1622 = vunpack.c.l.b16 %v894
    %v1623 = vunpack.c.h.b16 %v894
    %v1624 = vunpack.c.l.b16 %v895
    %v1625 = vunpack.c.h.b16 %v895
    %v1626 = vunpack.c.l.b16 %v896
    %v1627 = vunpack.c.h.b16 %v896
    %v1628 = vunpack.c.l.b16 %v897
    %v1629 = vunpack.c.h.b16 %v897
    %v1630 = vunpack.c.l.b16 %v898
    %v1631 = vunpack.c.h.b16 %v898
    %v1632 = vunpack.c.l.b16 %v899
    %v1633 = vunpack.c.h.b16 %v899
    %v1634 = vunpack.c.l.b16 %v900
    %v1635 = vunpack.c.h.b16 %v900
    %v1636 = vunpack.c.l.b16 %v901
    %v1637 = vunpack.c.h.b16 %v901
    %v1638 = vunpack.c.l.b16 %v902
    %v1639 = vunpack.c.h.b16 %v902
    %v1640 = vunpack.c.l.b16 %v903
    %v1641 = vunpack.c.h.b16 %v903
    %v1642 = vunpack.c.l.b16 %v904
    %v1643 = vunpack.c.h.b16 %v904
    %v1644 = vunpack.c.l.b16 %v905
    %v1645 = vunpack.c.h.b16 %v905
    %v1646 = vunpack.c.l.b16 %v906
    %v1647 = vunpack.c.h.b16 %v906
    %v1648 = vunpack.c.l.b16 %v907
    %v1649 = vunpack.c.h.b16 %v907
    %v1650 = vunpack.c.l.b16 %v908
    %v1651 = vunpack.c.h.b16 %v908
    %v1652 = vunpack.c.l.b16 %v909
    %v1653 = vunpack.c.h.b16 %v909
    %v1654 = vunpack.c.l.b16 %v910
    %v1655 = vunpack.c.h.b16 %v910
    %v1656 = vunpack.c.l.b16 %v911
    %v1657 = vunpack.c.h.b16 %v911
    %v1658 = vunpack.c.l.b16 %v912
    %v1659 = vunpack.c.h.b16 %v912
    %v1660 = vunpack.c.l.b16 %v913
    %v1661 = vunpack.c.h.b16 %v913
    %v1662 = vunpack.c.l.b16 %v914
    %v1663 = vunpack.c.h.b16 %v914
    %v1664 = vunpack.c.l.b16 %v915
    %v1665 = vunpack.c.h.b16 %v915
    %v1666 = vunpack.c.l.b16 %v916
    %v1667 = vunpack.c.h.b16 %v916
    %v1668 = vunpack.c.l.b16 %v917
    %v1669 = vunpack.c.h.b16 %v917
    %v1670 = vunpack.c.l.b16 %v918
    %v1671 = vunpack.c.h.b16 %v918
    %v1672 = vunpack.c.l.b16 %v919
    %v1673 = vunpack.c.h.b16 %v919
    %v1674 = vunpack.c.l.b16 %v920
    %v1675 = vunpack.c.h.b16 %v920
    %v1676 = vunpack.c.l.b16 %v921
    %v1677 = vunpack.c.h.b16 %v921
    %v1678 = vunpack.c.l.b16 %v922
    %v1679 = vunpack.c.h.b16 %v922
    %v1680 = vunpack.c.l.b16 %v923
    %v1681 = vunpack.c.h.b16 %v923
    %v1682 = vunpack.c.l.b16 %v924
    %v1683 = vunpack.c.h.b16 %v924
    %v1684 = vunpack.c.l.b16 %v925
    %v1685 = vunpack.c.h.b16 %v925
    %v1686 = vunpack.c.l.b16 %v926
    %v1687 = vunpack.c.h.b16 %v926
    %v1688 = vunpack.c.l.b16 %v927
    %v1689 = vunpack.c.h.b16 %v927
    %v1690 = vunpack.c.l.b16 %v928
    %v1691 = vunpack.c.h.b16 %v928
    %v1692 = vunpack.c.l.b16 %v929
    %v1693 = vunpack.c.h.b16 %v929
    %v1694 = vunpack.c.l.b16 %v930
    %v1695 = vunpack.c.h.b16 %v930
    %v1696 = vunpack.c.l.b16 %v931
    %v1697 = vunpack.c.h.b16 %v931
    %v1698 = vunpack.c.l.b16 %v932
    %v1699 = vunpack.c.h.b16 %v932
    %v1700 = vunpack.c.l.b16 %v933
    %v1701 = vunpack.c.h.b16 %v933
    %v1702 = vunpack.c.l.b16 %v934
    %v1703 = vunpack.c.h.b16 %v934
    %v1704 = vunpack.c.l.b16 %v935
    %v1705 = vunpack.c.h.b16 %v935
    %v1706 = vunpack.c.l.b16 %v936
    %v1707 = vunpack.c.h.b16 %v936
    %v1708 = vunpack.c.l.b16 %v937
    %v1709 = vunpack.c.h.b16 %v937
    %v1710 = vunpack.c.l.b16 %v938
    %v1711 = vunpack.c.h.b16 %v938
    %v1712 = vunpack.c.l.b16 %v939
    %v1713 = vunpack.c.h.b16 %v939
    %v1714 = vunpack.c.l.b16 %v940
    %v1715 = vunpack.c.h.b16 %v940
    %v1716 = vunpack.c.l.b16 %v941
    %v1717 = vunpack.c.h.b16 %v941
    %v1718 = vunpack.c.l.b16 %v942
    %v1719 = vunpack.c.h.b16 %v942
    %v1720 = vunpack.c.l.b16 %v943
    %v1721 = vunpack.c.h.b16 %v943
    %v1722 = vunpack.c.l.b16 %v944
    %v1723 = vunpack.c.h.b16 %v944
    %v1724 = vunpack.c.l.b16 %v945
    %v1725 = vunpack.c.h.b16 %v945
    %v1726 = vunpack.c.l.b16 %v946
    %v1727 = vunpack.c.h.b16 %v946
    %v1728 = vunpack.c.l.b16 %v947
    %v1729 = vunpack.c.h.b16 %v947
    %v1730 = vunpack.c.l.b16 %v948
    %v1731 = vunpack.c.h.b16 %v948
    %v1732 = vunpack.c.l.b16 %v949
    %v1733 = vunpack.c.h.b16 %v949
    %v1734 = vunpack.c.l.b16 %v950
    %v1735 = vunpack.c.h.b16 %v950
    %v1736 = vunpack.c.l.b16 %v951
    %v1737 = vunpack.c.h.b16 %v951
    %v1738 = vunpack.c.l.b16 %v952
    %v1739 = vunpack.c.h.b16 %v952
    %v1740 = vunpack.c.l.b16 %v953
    %v1741 = vunpack.c.h.b16 %v953
    %v1742 = vunpack.c.l.b16 %v954
    %v1743 = vunpack.c.h.b16 %v954
    %v1744 = vunpack.c.l.b16 %v955
    %v1745 = vunpack.c.h.b16 %v955
    %v1746 = vpack.c.b16 %v1238, %v1234
    %v1747 = vpack.c.b16 %v1239, %v1235
    %v1748 = vpack.c.b16 %v1240, %v1236
    %v1749 = vpack.c.b16 %v1241, %v1237
    %v1750 = vpack.c.b16 %v1246, %v1242
    %v1751 = vpack.c.b16 %v1247, %v1243
    %v1752 = vpack.c.b16 %v1248, %v1244
    %v1753 = vpack.c.b16 %v1249, %v1245
    %v1754 = vpack.c.b16 %v1254, %v1250
    %v1755 = vpack.c.b16 %v1255, %v1251
    %v1756 = vpack.c.b16 %v1256, %v1252
    %v1757 = vpack.c.b16 %v1257, %v1253
    %v1758 = vpack.c.b16 %v1262, %v1258
    %v1759 = vpack.c.b16 %v1263, %v1259
    %v1760 = vpack.c.b16 %v1264, %v1260
    %v1761 = vpack.c.b16 %v1265, %v1261
    %v1762 = vpack.c.b16 %v1270, %v1266
    %v1763 = vpack.c.b16 %v1271, %v1267
    %v1764 = vpack.c.b16 %v1272, %v1268
    %v1765 = vpack.c.b16 %v1273, %v1269
    %v1766 = vpack.c.b16 %v1278, %v1274
    %v1767 = vpack.c.b16 %v1279, %v1275
    %v1768 = vpack.c.b16 %v1280, %v1276
    %v1769 = vpack.c.b16 %v1281, %v1277
    %v1770 = vpack.c.b16 %v1286, %v1282
    %v1771 = vpack.c.b16 %v1287, %v1283
    %v1772 = vpack.c.b16 %v1288, %v1284
    %v1773 = vpack.c.b16 %v1289, %v1285
    %v1774 = vpack.c.b16 %v1294, %v1290
    %v1775 = vpack.c.b16 %v1295, %v1291
    %v1776 = vpack.c.b16 %v1296, %v1292
    %v1777 = vpack.c.b16 %v1297, %v1293
    %v1778 = vpack.c.b16 %v1302, %v1298
    %v1779 = vpack.c.b16 %v1303, %v1299
    %v1780 = vpack.c.b16 %v1304, %v1300
    %v1781 = vpack.c.b16 %v1305, %v1301
    %v1782 = vpack.c.b16 %v1310, %v1306
    %v1783 = vpack.c.b16 %v1311, %v1307
    %v1784 = vpack.c.b16 %v1312, %v1308
    %v1785 = vpack.c.b16 %v1313, %v1309
    %v1786 = vpack.c.b16 %v1318, %v1314
    %v1787 = vpack.c.b16 %v1319, %v1315
    %v1788 = vpack.c.b16 %v1320, %v1316
    %v1789 = vpack.c.b16 %v1321, %v1317
    %v1790 = vpack.c.b16 %v1326, %v1322
    %v1791 = vpack.c.b16 %v1327, %v1323
    %v1792 = vpack.c.b16 %v1328, %v1324
    %v1793 = vpack.c.b16 %v1329, %v1325
    %v1794 = vpack.c.b16 %v1334, %v1330
    %v1795 = vpack.c.b16 %v1335, %v1331
    %v1796 = vpack.c.b16 %v1336, %v1332
    %v1797 = vpack.c.b16 %v1337, %v1333
    %v1798 = vpack.c.b16 %v1342, %v1338
    %v1799 = vpack.c.b16 %v1343, %v1339
    %v1800 = vpack.c.b16 %v1344, %v1340
    %v1801 = vpack.c.b16 %v1345, %v1341
    %v1802 = vpack.c.b16 %v1350, %v1346
    %v1803 = vpack.c.b16 %v1351, %v1347
    %v1804 = vpack.c.b16 %v1352, %v1348
    %v1805 = vpack.c.b16 %v1353, %v1349
    %v1806 = vpack.c.b16 %v1358, %v1354
    %v1807 = vpack.c.b16 %v1359, %v1355
    %v1808 = vpack.c.b16 %v1360, %v1356
    %v1809 = vpack.c.b16 %v1361, %v1357
    %v1810 = vpack.c.b16 %v1366, %v1362
    %v1811 = vpack.c.b16 %v1367, %v1363
    %v1812 = vpack.c.b16 %v1368, %v1364
    %v1813 = vpack.c.b16 %v1369, %v1365
    %v1814 = vpack.c.b16 %v1374, %v1370
    %v1815 = vpack.c.b16 %v1375, %v1371
    %v1816 = vpack.c.b16 %v1376, %v1372
    %v1817 = vpack.c.b16 %v1377, %v1373
    %v1818 = vpack.c.b16 %v1382, %v1378
    %v1819 = vpack.c.b16 %v1383, %v1379
    %v1820 = vpack.c.b16 %v1384, %v1380
    %v1821 = vpack.c.b16 %v1385, %v1381
    %v1822 = vpack.c.b16 %v1390, %v1386
    %v1823 = vpack.c.b16 %v1391, %v1387
    %v1824 = vpack.c.b16 %v1392, %v1388
    %v1825 = vpack.c.b16 %v1393, %v1389
    %v1826 = vpack.c.b16 %v1398, %v1394
    %v1827 = vpack.c.b16 %v1399, %v1395
    %v1828 = vpack.c.b16 %v1400, %v1396
    %v1829 = vpack.c.b16 %v1401, %v1397
    %v1830 = vpack.c.b16 %v1406, %v1402
    %v1831 = vpack.c.b16 %v1407, %v1403
    %v1832 = vpack.c.b16 %v1408, %v1404
    %v1833 = vpack.c.b16 %v1409, %v1405
    %v1834 = vpack.c.b16 %v1414, %v1410
    %v1835 = vpack.c.b16 %v1415, %v1411
    %v1836 = vpack.c.b16 %v1416, %v1412
    %v1837 = vpack.c.b16 %v1417, %v1413
    %v1838 = vpack.c.b16 %v1422, %v1418
    %v1839 = vpack.c.b16 %v1423, %v1419
    %v1840 = vpack.c.b16 %v1424, %v1420
    %v1841 = vpack.c.b16 %v1425, %v1421
    %v1842 = vpack.c.b16 %v1430, %v1426
    %v1843 = vpack.c.b16 %v1431, %v1427
    %v1844 = vpack.c.b16 %v1432, %v1428
    %v1845 = vpack.c.b16 %v1433, %v1429
    %v1846 = vpack.c.b16 %v1438, %v1434
    %v1847 = vpack.c.b16 %v1439, %v1435
    %v1848 = vpack.c.b16 %v1440, %v1436
    %v1849 = vpack.c.b16 %v1441, %v1437
    %v1850 = vpack.c.b16 %v1446, %v1442
    %v1851 = vpack.c.b16 %v1447, %v1443
    %v1852 = vpack.c.b16 %v1448, %v1444
    %v1853 = vpack.c.b16 %v1449, %v1445
    %v1854 = vpack.c.b16 %v1454, %v1450
    %v1855 = vpack.c.b16 %v1455, %v1451
    %v1856 = vpack.c.b16 %v1456, %v1452
    %v1857 = vpack.c.b16 %v1457, %v1453
    %v1858 = vpack.c.b16 %v1462, %v1458
    %v1859 = vpack.c.b16 %v1463, %v1459
    %v1860 = vpack.c.b16 %v1464, %v1460
    %v1861 = vpack.c.b16 %v1465, %v1461
    %v1862 = vpack.c.b16 %v1470, %v1466
    %v1863 = vpack.c.b16 %v1471, %v1467
    %v1864 = vpack.c.b16 %v1472, %v1468
    %v1865 = vpack.c.b16 %v1473, %v1469
    %v1866 = vpack.c.b16 %v1478, %v1474
    %v1867 = vpack.c.b16 %v1479, %v1475
    %v1868 = vpack.c.b16 %v1480, %v1476
    %v1869 = vpack.c.b16 %v1481, %v1477
    %v1870 = vpack.c.b16 %v1486, %v1482
    %v1871 = vpack.c.b16 %v1487, %v1483
    %v1872 = vpack.c.b16 %v1488, %v1484
    %v1873 = vpack.c.b16 %v1489, %v1485
    %v1874 = vpack.c.b16 %v1494, %v1490
    %v1875 = vpack.c.b16 %v1495, %v1491
    %v1876 = vpack.c.b16 %v1496, %v1492
    %v1877 = vpack.c.b16 %v1497, %v1493
    %v1878 = vpack.c.b16 %v1502, %v1498
    %v1879 = vpack.c.b16 %v1503, %v1499
    %v1880 = vpack.c.b16 %v1504, %v1500
    %v1881 = vpack.c.b16 %v1505, %v1501
    %v1882 = vpack.c.b16 %v1510, %v1506
    %v1883 = vpack.c.b16 %v1511, %v1507
    %v1884 = vpack.c.b16 %v1512, %v1508
    %v1885 = vpack.c.b16 %v1513, %v1509
    %v1886 = vpack.c.b16 %v1518, %v1514
    %v1887 = vpack.c.b16 %v1519, %v1515
    %v1888 = vpack.c.b16 %v1520, %v1516
    %v1889 = vpack.c.b16 %v1521, %v1517
    %v1890 = vpack.c.b16 %v1526, %v1522
    %v1891 = vpack.c.b16 %v1527, %v1523
    %v1892 = vpack.c.b16 %v1528, %v1524
    %v1893 = vpack.c.b16 %v1529, %v1525
    %v1894 = vpack.c.b16 %v1534, %v1530
    %v1895 = vpack.c.b16 %v1535, %v1531
    %v1896 = vpack.c.b16 %v1536, %v1532
    %v1897 = vpack.c.b16 %v1537, %v1533
    %v1898 = vpack.c.b16 %v1542, %v1538
    %v1899 = vpack.c.b16 %v1543, %v1539
    %v1900 = vpack.c.b16 %v1544, %v1540
    %v1901 = vpack.c.b16 %v1545, %v1541
    %v1902 = vpack.c.b16 %v1550, %v1546
    %v1903 = vpack.c.b16 %v1551, %v1547
    %v1904 = vpack.c.b16 %v1552, %v1548
    %v1905 = vpack.c.b16 %v1553, %v1549
    %v1906 = vpack.c.b16 %v1558, %v1554
    %v1907 = vpack.c.b16 %v1559, %v1555
    %v1908 = vpack.c.b16 %v1560, %v1556
    %v1909 = vpack.c.b16 %v1561, %v1557
    %v1910 = vpack.c.b16 %v1566, %v1562
    %v1911 = vpack.c.b16 %v1567, %v1563
    %v1912 = vpack.c.b16 %v1568, %v1564
    %v1913 = vpack.c.b16 %v1569, %v1565
    %v1914 = vpack.c.b16 %v1574, %v1570
    %v1915 = vpack.c.b16 %v1575, %v1571
    %v1916 = vpack.c.b16 %v1576, %v1572
    %v1917 = vpack.c.b16 %v1577, %v1573
    %v1918 = vpack.c.b16 %v1582, %v1578
    %v1919 = vpack.c.b16 %v1583, %v1579
    %v1920 = vpack.c.b16 %v1584, %v1580
    %v1921 = vpack.c.b16 %v1585, %v1581
    %v1922 = vpack.c.b16 %v1590, %v1586
    %v1923 = vpack.c.b16 %v1591, %v1587
    %v1924 = vpack.c.b16 %v1592, %v1588
    %v1925 = vpack.c.b16 %v1593, %v1589
    %v1926 = vpack.c.b16 %v1598, %v1594
    %v1927 = vpack.c.b16 %v1599, %v1595
    %v1928 = vpack.c.b16 %v1600, %v1596
    %v1929 = vpack.c.b16 %v1601, %v1597
    %v1930 = vpack.c.b16 %v1606, %v1602
    %v1931 = vpack.c.b16 %v1607, %v1603
    %v1932 = vpack.c.b16 %v1608, %v1604
    %v1933 = vpack.c.b16 %v1609, %v1605
    %v1934 = vpack.c.b16 %v1614, %v1610
    %v1935 = vpack.c.b16 %v1615, %v1611
    %v1936 = vpack.c.b16 %v1616, %v1612
    %v1937 = vpack.c.b16 %v1617, %v1613
    %v1938 = vpack.c.b16 %v1622, %v1618
    %v1939 = vpack.c.b16 %v1623, %v1619
    %v1940 = vpack.c.b16 %v1624, %v1620
    %v1941 = vpack.c.b16 %v1625, %v1621
    %v1942 = vpack.c.b16 %v1630, %v1626
    %v1943 = vpack.c.b16 %v1631, %v1627
    %v1944 = vpack.c.b16 %v1632, %v1628
    %v1945 = vpack.c.b16 %v1633, %v1629
    %v1946 = vpack.c.b16 %v1638, %v1634
    %v1947 = vpack.c.b16 %v1639, %v1635
    %v1948 = vpack.c.b16 %v1640, %v1636
    %v1949 = vpack.c.b16 %v1641, %v1637
    %v1950 = vpack.c.b16 %v1646, %v1642
    %v1951 = vpack.c.b16 %v1647, %v1643
    %v1952 = vpack.c.b16 %v1648, %v1644
    %v1953 = vpack.c.b16 %v1649, %v1645
    %v1954 = vpack.c.b16 %v1654, %v1650
    %v1955 = vpack.c.b16 %v1655, %v1651
    %v1956 = vpack.c.b16 %v1656, %v1652
    %v1957 = vpack.c.b16 %v1657, %v1653
    %v1958 = vpack.c.b16 %v1662, %v1658
    %v1959 = vpack.c.b16 %v1663, %v1659
    %v1960 = vpack.c.b16 %v1664, %v1660
    %v1961 = vpack.c.b16 %v1665, %v1661
    %v1962 = vpack.c.b16 %v1670, %v1666
    %v1963 = vpack.c.b16 %v1671, %v1667
    %v1964 = vpack.c.b16 %v1672, %v1668
    %v1965 = vpack.c.b16 %v1673, %v1669
    %v1966 = vpack.c.b16 %v1678, %v1674
    %v1967 = vpack.c.b16 %v1679, %v1675
    %v1968 = vpack.c.b16 %v1680, %v1676
    %v1969 = vpack.c.b16 %v1681, %v1677
    %v1970 = vpack.c.b16 %v1686, %v1682
    %v1971 = vpack.c.b16 %v1687, %v1683
    %v1972 = vpack.c.b16 %v1688, %v1684
    %v1973 = vpack.c.b16 %v1689, %v1685
    %v1974 = vpack.c.b16 %v1694, %v1690
    %v1975 = vpack.c.b16 %v1695, %v1691
    %v1976 = vpack.c.b16 %v1696, %v1692
    %v1977 = vpack.c.b16 %v1697, %v1693
    %v1978 = vpack.c.b16 %v1702, %v1698
    %v1979 = vpack.c.b16 %v1703, %v1699
    %v1980 = vpack.c.b16 %v1704, %v1700
    %v1981 = vpack.c.b16 %v1705, %v1701
    %v1982 = vpack.c.b16 %v1710, %v1706
    %v1983 = vpack.c.b16 %v1711, %v1707
    %v1984 = vpack.c.b16 %v1712, %v1708
    %v1985 = vpack.c.b16 %v1713, %v1709
    %v1986 = vpack.c.b16 %v1718, %v1714
    %v1987 = vpack.c.b16 %v1719, %v1715
    %v1988 = vpack.c.b16 %v1720, %v1716
    %v1989 = vpack.c.b16 %v1721, %v1717
    %v1990 = vpack.c.b16 %v1726, %v1722
    %v1991 = vpack.c.b16 %v1727, %v1723
    %v1992 = vpack.c.b16 %v1728, %v1724
    %v1993 = vpack.c.b16 %v1729, %v1725
    %v1994 = vpack.c.b16 %v1734, %v1730
    %v1995 = vpack.c.b16 %v1735, %v1731
    %v1996 = vpack.c.b16 %v1736, %v1732
    %v1997 = vpack.c.b16 %v1737, %v1733
    %v1998 = vpack.c.b16 %v1742, %v1738
    %v1999 = vpack.c.b16 %v1743, %v1739
    %v2000 = vpack.c.b16 %v1744, %v1740
    %v2001 = vpack.c.b16 %v1745, %v1741
    %2258 = vmatprep.subr.bf16.mxu0 %v1747
    %2259 = vmatpush1.bf16.msra.mxu0 %v1746
    %2260 = vmatprep.subr.bf16.mxu0 %v1751
    %2261 = vmatpush1.bf16.msra.mxu0 %v1750
    %2262 = vmatprep.subr.bf16.mxu0 %v1755
    %2263 = vmatpush1.bf16.msra.mxu0 %v1754
    %2264 = vmatprep.subr.bf16.mxu0 %v1759
    %2265 = vmatpush1.bf16.msra.mxu0 %v1758
    %2266 = vmatprep.subr.bf16.mxu0 %v1763
    %2267 = vmatpush1.bf16.msra.mxu0 %v1762
    %2268 = vmatprep.subr.bf16.mxu0 %v1767
    %2269 = vmatpush1.bf16.msra.mxu0 %v1766
    %2270 = vmatprep.subr.bf16.mxu0 %v1771
    %2271 = vmatpush1.bf16.msra.mxu0 %v1770
    %2272 = vmatprep.subr.bf16.mxu0 %v1775
    %2273 = vmatpush1.bf16.msra.mxu0 %v1774
    %2274 = vmatprep.subr.bf16.mxu0 %v1779
    %2275 = vmatpush1.bf16.msra.mxu0 %v1778
    %2276 = vmatprep.subr.bf16.mxu0 %v1783
    %2277 = vmatpush1.bf16.msra.mxu0 %v1782
    %2278 = vmatprep.subr.bf16.mxu0 %v1787
    %2279 = vmatpush1.bf16.msra.mxu0 %v1786
    %2280 = vmatprep.subr.bf16.mxu0 %v1791
    %2281 = vmatpush1.bf16.msra.mxu0 %v1790
    %2282 = vmatprep.subr.bf16.mxu0 %v1795
    %2283 = vmatpush1.bf16.msra.mxu0 %v1794
    %2284 = vmatprep.subr.bf16.mxu0 %v1799
    %2285 = vmatpush1.bf16.msra.mxu0 %v1798
    %2286 = vmatprep.subr.bf16.mxu0 %v1803
    %2287 = vmatpush1.bf16.msra.mxu0 %v1802
    %2288 = vmatprep.subr.bf16.mxu0 %v1807
    %2289 = vmatpush1.bf16.msra.mxu0 %v1806
    %2290 = vmatprep.mubr.bf16.mxu0 %v693
    %2291 = vmatmul.mubr.bf16.gmra.mrb[0].mxu0 %v692
    %v2292 = vpop.f32.mrb[0].mxu0
    %v2293 = vadd.f32 %v961, %v2292
    %v2294 = vpop.f32.mrb[0].mxu0
    %v2295 = vadd.f32 %v965, %v2294
    %v2296 = vpop.f32.mrb[0].mxu0
    %v2297 = vpop.f32.mrb[0].mxu0
    %2298 = vdwg.mxu0
    %2299 = vmatprep.subr.bf16.mxu0 %v1811
    %2300 = vmatpush1.bf16.msra.mxu0 %v1810
    %2301 = vmatprep.subr.bf16.mxu0 %v1815
    %2302 = vmatpush1.bf16.msra.mxu0 %v1814
    %2303 = vmatprep.subr.bf16.mxu0 %v1819
    %2304 = vmatpush1.bf16.msra.mxu0 %v1818
    %2305 = vmatprep.subr.bf16.mxu0 %v1823
    %2306 = vmatpush1.bf16.msra.mxu0 %v1822
    %2307 = vmatprep.subr.bf16.mxu0 %v1827
    %2308 = vmatpush1.bf16.msra.mxu0 %v1826
    %2309 = vmatprep.subr.bf16.mxu0 %v1831
    %2310 = vmatpush1.bf16.msra.mxu0 %v1830
    %2311 = vmatprep.subr.bf16.mxu0 %v1835
    %2312 = vmatpush1.bf16.msra.mxu0 %v1834
    %2313 = vmatprep.subr.bf16.mxu0 %v1839
    %2314 = vmatpush1.bf16.msra.mxu0 %v1838
    %2315 = vmatprep.subr.bf16.mxu0 %v1843
    %2316 = vmatpush1.bf16.msra.mxu0 %v1842
    %2317 = vmatprep.subr.bf16.mxu0 %v1847
    %2318 = vmatpush1.bf16.msra.mxu0 %v1846
    %2319 = vmatprep.subr.bf16.mxu0 %v1851
    %2320 = vmatpush1.bf16.msra.mxu0 %v1850
    %2321 = vmatprep.subr.bf16.mxu0 %v1855
    %2322 = vmatpush1.bf16.msra.mxu0 %v1854
    %2323 = vmatprep.subr.bf16.mxu0 %v1859
    %2324 = vmatpush1.bf16.msra.mxu0 %v1858
    %2325 = vmatprep.subr.bf16.mxu0 %v1863
    %2326 = vmatpush1.bf16.msra.mxu0 %v1862
    %2327 = vmatprep.subr.bf16.mxu0 %v1867
    %2328 = vmatpush1.bf16.msra.mxu0 %v1866
    %2329 = vmatprep.subr.bf16.mxu0 %v1871
    %2330 = vmatpush1.bf16.msra.mxu0 %v1870
    %2331 = vmatprep.mubr.bf16.mxu0 %v695
    %2332 = vmatmul.mubr.bf16.gmra.mrb[0].mxu0 %v694
    %v2333 = vpop.f32.mrb[0].mxu0
    %v2334 = vadd.f32 %v2293, %v2333
    %v2335 = vpop.f32.mrb[0].mxu0
    %v2336 = vadd.f32 %v2295, %v2335
    %v2337 = vpop.f32.mrb[0].mxu0
    %v2338 = vpop.f32.mrb[0].mxu0
    %2339 = vdwg.mxu0
    %2340 = vmatprep.subr.bf16.mxu0 %v1875
    %2341 = vmatpush1.bf16.msra.mxu0 %v1874
    %2342 = vmatprep.subr.bf16.mxu0 %v1879
    %2343 = vmatpush1.bf16.msra.mxu0 %v1878
    %2344 = vmatprep.subr.bf16.mxu0 %v1883
    %2345 = vmatpush1.bf16.msra.mxu0 %v1882
    %2346 = vmatprep.subr.bf16.mxu0 %v1887
    %2347 = vmatpush1.bf16.msra.mxu0 %v1886
    %2348 = vmatprep.subr.bf16.mxu0 %v1891
    %2349 = vmatpush1.bf16.msra.mxu0 %v1890
    %2350 = vmatprep.subr.bf16.mxu0 %v1895
    %2351 = vmatpush1.bf16.msra.mxu0 %v1894
    %2352 = vmatprep.subr.bf16.mxu0 %v1899
    %2353 = vmatpush1.bf16.msra.mxu0 %v1898
    %2354 = vmatprep.subr.bf16.mxu0 %v1903
    %2355 = vmatpush1.bf16.msra.mxu0 %v1902
    %2356 = vmatprep.subr.bf16.mxu0 %v1907
    %2357 = vmatpush1.bf16.msra.mxu0 %v1906
    %2358 = vmatprep.subr.bf16.mxu0 %v1911
    %2359 = vmatpush1.bf16.msra.mxu0 %v1910
    %2360 = vmatprep.subr.bf16.mxu0 %v1915
    %2361 = vmatpush1.bf16.msra.mxu0 %v1914
    %2362 = vmatprep.subr.bf16.mxu0 %v1919
    %2363 = vmatpush1.bf16.msra.mxu0 %v1918
    %2364 = vmatprep.subr.bf16.mxu0 %v1923
    %2365 = vmatpush1.bf16.msra.mxu0 %v1922
    %2366 = vmatprep.subr.bf16.mxu0 %v1927
    %2367 = vmatpush1.bf16.msra.mxu0 %v1926
    %2368 = vmatprep.subr.bf16.mxu0 %v1931
    %2369 = vmatpush1.bf16.msra.mxu0 %v1930
    %2370 = vmatprep.subr.bf16.mxu0 %v1935
    %2371 = vmatpush1.bf16.msra.mxu0 %v1934
    %2372 = vmatprep.mubr.bf16.mxu0 %v697
    %2373 = vmatmul.mubr.bf16.gmra.mrb[0].mxu0 %v696
    %v2374 = vpop.f32.mrb[0].mxu0
    %v2375 = vadd.f32 %v2334, %v2374
    %v2376 = vpop.f32.mrb[0].mxu0
    %v2377 = vadd.f32 %v2336, %v2376
    %v2378 = vpop.f32.mrb[0].mxu0
    %v2379 = vpop.f32.mrb[0].mxu0
    %2380 = vdwg.mxu0
    %2381 = vmatprep.subr.bf16.mxu0 %v1939
    %2382 = vmatpush1.bf16.msra.mxu0 %v1938
    %2383 = vmatprep.subr.bf16.mxu0 %v1943
    %2384 = vmatpush1.bf16.msra.mxu0 %v1942
    %2385 = vmatprep.subr.bf16.mxu0 %v1947
    %2386 = vmatpush1.bf16.msra.mxu0 %v1946
    %2387 = vmatprep.subr.bf16.mxu0 %v1951
    %2388 = vmatpush1.bf16.msra.mxu0 %v1950
    %2389 = vmatprep.subr.bf16.mxu0 %v1955
    %2390 = vmatpush1.bf16.msra.mxu0 %v1954
    %2391 = vmatprep.subr.bf16.mxu0 %v1959
    %2392 = vmatpush1.bf16.msra.mxu0 %v1958
    %2393 = vmatprep.subr.bf16.mxu0 %v1963
    %2394 = vmatpush1.bf16.msra.mxu0 %v1962
    %2395 = vmatprep.subr.bf16.mxu0 %v1967
    %2396 = vmatpush1.bf16.msra.mxu0 %v1966
    %2397 = vmatprep.subr.bf16.mxu0 %v1971
    %2398 = vmatpush1.bf16.msra.mxu0 %v1970
    %2399 = vmatprep.subr.bf16.mxu0 %v1975
    %2400 = vmatpush1.bf16.msra.mxu0 %v1974
    %2401 = vmatprep.subr.bf16.mxu0 %v1979
    %2402 = vmatpush1.bf16.msra.mxu0 %v1978
    %2403 = vmatprep.subr.bf16.mxu0 %v1983
    %2404 = vmatpush1.bf16.msra.mxu0 %v1982
    %2405 = vmatprep.subr.bf16.mxu0 %v1987
    %2406 = vmatpush1.bf16.msra.mxu0 %v1986
    %2407 = vmatprep.subr.bf16.mxu0 %v1991
    %2408 = vmatpush1.bf16.msra.mxu0 %v1990
    %2409 = vmatprep.subr.bf16.mxu0 %v1995
    %2410 = vmatpush1.bf16.msra.mxu0 %v1994
    %2411 = vmatprep.subr.bf16.mxu0 %v1999
    %2412 = vmatpush1.bf16.msra.mxu0 %v1998
    %2413 = vmatprep.mubr.bf16.mxu0 %v699
    %2414 = vmatmul.mubr.bf16.gmra.mrb[0].mxu0 %v698
    %v2415 = vpop.f32.mrb[0].mxu0
    %v2416 = vadd.f32 %v2375, %v2415
    %v2417 = vpop.f32.mrb[0].mxu0
    %v2418 = vadd.f32 %v2377, %v2417
    %v2419 = vpop.f32.mrb[0].mxu0
    %v2420 = vpop.f32.mrb[0].mxu0
    %2421 = vdwg.mxu0
    %2422 = vmatprep.subr.bf16.mxu0 %v1749
    %2423 = vmatpush1.bf16.msra.mxu0 %v1748
    %2424 = vmatprep.subr.bf16.mxu0 %v1753
    %2425 = vmatpush1.bf16.msra.mxu0 %v1752
    %2426 = vmatprep.subr.bf16.mxu0 %v1757
    %2427 = vmatpush1.bf16.msra.mxu0 %v1756
    %2428 = vmatprep.subr.bf16.mxu0 %v1761
    %2429 = vmatpush1.bf16.msra.mxu0 %v1760
    %2430 = vmatprep.subr.bf16.mxu0 %v1765
    %2431 = vmatpush1.bf16.msra.mxu0 %v1764
    %2432 = vmatprep.subr.bf16.mxu0 %v1769
    %2433 = vmatpush1.bf16.msra.mxu0 %v1768
    %2434 = vmatprep.subr.bf16.mxu0 %v1773
    %2435 = vmatpush1.bf16.msra.mxu0 %v1772
    %2436 = vmatprep.subr.bf16.mxu0 %v1777
    %2437 = vmatpush1.bf16.msra.mxu0 %v1776
    %2438 = vmatprep.subr.bf16.mxu0 %v1781
    %2439 = vmatpush1.bf16.msra.mxu0 %v1780
    %2440 = vmatprep.subr.bf16.mxu0 %v1785
    %2441 = vmatpush1.bf16.msra.mxu0 %v1784
    %2442 = vmatprep.subr.bf16.mxu0 %v1789
    %2443 = vmatpush1.bf16.msra.mxu0 %v1788
    %2444 = vmatprep.subr.bf16.mxu0 %v1793
    %2445 = vmatpush1.bf16.msra.mxu0 %v1792
    %2446 = vmatprep.subr.bf16.mxu0 %v1797
    %2447 = vmatpush1.bf16.msra.mxu0 %v1796
    %2448 = vmatprep.subr.bf16.mxu0 %v1801
    %2449 = vmatpush1.bf16.msra.mxu0 %v1800
    %2450 = vmatprep.subr.bf16.mxu0 %v1805
    %2451 = vmatpush1.bf16.msra.mxu0 %v1804
    %2452 = vmatprep.subr.bf16.mxu0 %v1809
    %2453 = vmatpush1.bf16.msra.mxu0 %v1808
    %2454 = vmatprep.mubr.bf16.mxu0 %v693
    %2455 = vmatmul.mubr.bf16.gmra.mrb[0].mxu0 %v692
    %v2456 = vpop.f32.mrb[0].mxu0
    %v2457 = vadd.f32 %v969, %v2456
    %v2458 = vpop.f32.mrb[0].mxu0
    %v2459 = vadd.f32 %v973, %v2458
    %v2460 = vpop.f32.mrb[0].mxu0
    %v2461 = vpop.f32.mrb[0].mxu0
    %2462 = vdwg.mxu0
    %2463 = vmatprep.subr.bf16.mxu0 %v1813
    %2464 = vmatpush1.bf16.msra.mxu0 %v1812
    %2465 = vmatprep.subr.bf16.mxu0 %v1817
    %2466 = vmatpush1.bf16.msra.mxu0 %v1816
    %2467 = vmatprep.subr.bf16.mxu0 %v1821
    %2468 = vmatpush1.bf16.msra.mxu0 %v1820
    %2469 = vmatprep.subr.bf16.mxu0 %v1825
    %2470 = vmatpush1.bf16.msra.mxu0 %v1824
    %2471 = vmatprep.subr.bf16.mxu0 %v1829
    %2472 = vmatpush1.bf16.msra.mxu0 %v1828
    %2473 = vmatprep.subr.bf16.mxu0 %v1833
    %2474 = vmatpush1.bf16.msra.mxu0 %v1832
    %2475 = vmatprep.subr.bf16.mxu0 %v1837
    %2476 = vmatpush1.bf16.msra.mxu0 %v1836
    %2477 = vmatprep.subr.bf16.mxu0 %v1841
    %2478 = vmatpush1.bf16.msra.mxu0 %v1840
    %2479 = vmatprep.subr.bf16.mxu0 %v1845
    %2480 = vmatpush1.bf16.msra.mxu0 %v1844
    %2481 = vmatprep.subr.bf16.mxu0 %v1849
    %2482 = vmatpush1.bf16.msra.mxu0 %v1848
    %2483 = vmatprep.subr.bf16.mxu0 %v1853
    %2484 = vmatpush1.bf16.msra.mxu0 %v1852
    %2485 = vmatprep.subr.bf16.mxu0 %v1857
    %2486 = vmatpush1.bf16.msra.mxu0 %v1856
    %2487 = vmatprep.subr.bf16.mxu0 %v1861
    %2488 = vmatpush1.bf16.msra.mxu0 %v1860
    %2489 = vmatprep.subr.bf16.mxu0 %v1865
    %2490 = vmatpush1.bf16.msra.mxu0 %v1864
    %2491 = vmatprep.subr.bf16.mxu0 %v1869
    %2492 = vmatpush1.bf16.msra.mxu0 %v1868
    %2493 = vmatprep.subr.bf16.mxu0 %v1873
    %2494 = vmatpush1.bf16.msra.mxu0 %v1872
    %2495 = vmatprep.mubr.bf16.mxu0 %v695
    %2496 = vmatmul.mubr.bf16.gmra.mrb[0].mxu0 %v694
    %v2497 = vpop.f32.mrb[0].mxu0
    %v2498 = vadd.f32 %v2457, %v2497
    %v2499 = vpop.f32.mrb[0].mxu0
    %v2500 = vadd.f32 %v2459, %v2499
    %v2501 = vpop.f32.mrb[0].mxu0
    %v2502 = vpop.f32.mrb[0].mxu0
    %2503 = vdwg.mxu0
    %2504 = vmatprep.subr.bf16.mxu0 %v1877
    %2505 = vmatpush1.bf16.msra.mxu0 %v1876
    %2506 = vmatprep.subr.bf16.mxu0 %v1881
    %2507 = vmatpush1.bf16.msra.mxu0 %v1880
    %2508 = vmatprep.subr.bf16.mxu0 %v1885
    %2509 = vmatpush1.bf16.msra.mxu0 %v1884
    %2510 = vmatprep.subr.bf16.mxu0 %v1889
    %2511 = vmatpush1.bf16.msra.mxu0 %v1888
    %2512 = vmatprep.subr.bf16.mxu0 %v1893
    %2513 = vmatpush1.bf16.msra.mxu0 %v1892
    %2514 = vmatprep.subr.bf16.mxu0 %v1897
    %2515 = vmatpush1.bf16.msra.mxu0 %v1896
    %2516 = vmatprep.subr.bf16.mxu0 %v1901
    %2517 = vmatpush1.bf16.msra.mxu0 %v1900
    %2518 = vmatprep.subr.bf16.mxu0 %v1905
    %2519 = vmatpush1.bf16.msra.mxu0 %v1904
    %2520 = vmatprep.subr.bf16.mxu0 %v1909
    %2521 = vmatpush1.bf16.msra.mxu0 %v1908
    %2522 = vmatprep.subr.bf16.mxu0 %v1913
    %2523 = vmatpush1.bf16.msra.mxu0 %v1912
    %2524 = vmatprep.subr.bf16.mxu0 %v1917
    %2525 = vmatpush1.bf16.msra.mxu0 %v1916
    %2526 = vmatprep.subr.bf16.mxu0 %v1921
    %2527 = vmatpush1.bf16.msra.mxu0 %v1920
    %2528 = vmatprep.subr.bf16.mxu0 %v1925
    %2529 = vmatpush1.bf16.msra.mxu0 %v1924
    %2530 = vmatprep.subr.bf16.mxu0 %v1929
    %2531 = vmatpush1.bf16.msra.mxu0 %v1928
    %2532 = vmatprep.subr.bf16.mxu0 %v1933
    %2533 = vmatpush1.bf16.msra.mxu0 %v1932
    %2534 = vmatprep.subr.bf16.mxu0 %v1937
    %2535 = vmatpush1.bf16.msra.mxu0 %v1936
    %2536 = vmatprep.mubr.bf16.mxu0 %v697
    %2537 = vmatmul.mubr.bf16.gmra.mrb[0].mxu0 %v696
    %v2538 = vpop.f32.mrb[0].mxu0
    %v2539 = vadd.f32 %v2498, %v2538
    %v2540 = vpop.f32.mrb[0].mxu0
    %v2541 = vadd.f32 %v2500, %v2540
    %v2542 = vpop.f32.mrb[0].mxu0
    %v2543 = vpop.f32.mrb[0].mxu0
    %2544 = vdwg.mxu0
    %2545 = vmatprep.subr.bf16.mxu0 %v1941
    %2546 = vmatpush1.bf16.msra.mxu0 %v1940
    %2547 = vmatprep.subr.bf16.mxu0 %v1945
    %2548 = vmatpush1.bf16.msra.mxu0 %v1944
    %2549 = vmatprep.subr.bf16.mxu0 %v1949
    %2550 = vmatpush1.bf16.msra.mxu0 %v1948
    %2551 = vmatprep.subr.bf16.mxu0 %v1953
    %2552 = vmatpush1.bf16.msra.mxu0 %v1952
    %2553 = vmatprep.subr.bf16.mxu0 %v1957
    %2554 = vmatpush1.bf16.msra.mxu0 %v1956
    %2555 = vmatprep.subr.bf16.mxu0 %v1961
    %2556 = vmatpush1.bf16.msra.mxu0 %v1960
    %2557 = vmatprep.subr.bf16.mxu0 %v1965
    %2558 = vmatpush1.bf16.msra.mxu0 %v1964
    %2559 = vmatprep.subr.bf16.mxu0 %v1969
    %2560 = vmatpush1.bf16.msra.mxu0 %v1968
    %2561 = vmatprep.subr.bf16.mxu0 %v1973
    %2562 = vmatpush1.bf16.msra.mxu0 %v1972
    %2563 = vmatprep.subr.bf16.mxu0 %v1977
    %2564 = vmatpush1.bf16.msra.mxu0 %v1976
    %2565 = vmatprep.subr.bf16.mxu0 %v1981
    %2566 = vmatpush1.bf16.msra.mxu0 %v1980
    %2567 = vmatprep.subr.bf16.mxu0 %v1985
    %2568 = vmatpush1.bf16.msra.mxu0 %v1984
    %2569 = vmatprep.subr.bf16.mxu0 %v1989
    %2570 = vmatpush1.bf16.msra.mxu0 %v1988
    %2571 = vmatprep.subr.bf16.mxu0 %v1993
    %2572 = vmatpush1.bf16.msra.mxu0 %v1992
    %2573 = vmatprep.subr.bf16.mxu0 %v1997
    %2574 = vmatpush1.bf16.msra.mxu0 %v1996
    %2575 = vmatprep.subr.bf16.mxu0 %v2001
    %2576 = vmatpush1.bf16.msra.mxu0 %v2000
    %2577 = vmatprep.mubr.bf16.mxu0 %v699
    %2578 = vmatmul.mubr.bf16.gmra.mrb[0].mxu0 %v698
    %v2579 = vpop.f32.mrb[0].mxu0
    %v2580 = vadd.f32 %v2539, %v2579
    %v2581 = vpop.f32.mrb[0].mxu0
    %v2582 = vadd.f32 %v2541, %v2581
    %v2583 = vpop.f32.mrb[0].mxu0
    %v2584 = vpop.f32.mrb[0].mxu0
    %2585 = vdwg.mxu0
    %v2586 = vmax.f32 %v2416, 0.0
    %v2587 = vmax.f32 %v2418, 0.0
    %v2588 = vmax.f32 %v2580, 0.0
    %v2589 = vmax.f32 %v2582, 0.0
    %v2590 = vpack.c.bf16 %v2586, %v2586
    %v2591 = vpack.c.bf16 %v2587, %v2587
    %v2592 = vpack.c.bf16 %v2588, %v2588
    %v2593 = vpack.c.bf16 %v2589, %v2589
    %v2594 = vld [vmem:[#allocation10] sm:$0xf]
    %v2595 = vld [vmem:[#allocation10 + $0x4] sm:$0xf]
    %v2596 = vld [vmem:[#allocation10 + $0x8] sm:$0xf]
    %v2597 = vld [vmem:[#allocation10 + $0xc] sm:$0xf]
    %v2598 = vld [vmem:[#allocation10 + $0x10] sm:$0xf]
    %v2599 = vld [vmem:[#allocation10 + $0x14] sm:$0xf]
    %v2600 = vld [vmem:[#allocation10 + $0x18] sm:$0xf]
    %v2601 = vld [vmem:[#allocation10 + $0x1c] sm:$0xf]
    %v2602 = vld [vmem:[#allocation10 + $0x20] sm:$0xf]
    %v2603 = vld [vmem:[#allocation10 + $0x24] sm:$0xf]
    %v2604 = vld [vmem:[#allocation10 + $0x28] sm:$0xf]
    %v2605 = vld [vmem:[#allocation10 + $0x2c] sm:$0xf]
    %v2606 = vld [vmem:[#allocation10 + $0x30] sm:$0xf]
    %v2607 = vld [vmem:[#allocation10 + $0x34] sm:$0xf]
    %v2608 = vld [vmem:[#allocation10 + $0x38] sm:$0xf]
    %v2609 = vld [vmem:[#allocation10 + $0x3c] sm:$0xf]
    %v2610 = vld [vmem:[#allocation10 + $0x40] sm:$0xf]
    %v2611 = vld [vmem:[#allocation10 + $0x44] sm:$0xf]
    %v2612 = vld [vmem:[#allocation10 + $0x48] sm:$0xf]
    %v2613 = vld [vmem:[#allocation10 + $0x4c] sm:$0xf]
    %v2614 = vld [vmem:[#allocation10 + $0x50] sm:$0xf]
    %v2615 = vld [vmem:[#allocation10 + $0x54] sm:$0xf]
    %v2616 = vld [vmem:[#allocation10 + $0x58] sm:$0xf]
    %v2617 = vld [vmem:[#allocation10 + $0x5c] sm:$0xf]
    %v2618 = vld [vmem:[#allocation10 + $0x60] sm:$0xf]
    %v2619 = vld [vmem:[#allocation10 + $0x64] sm:$0xf]
    %v2620 = vld [vmem:[#allocation10 + $0x68] sm:$0xf]
    %v2621 = vld [vmem:[#allocation10 + $0x6c] sm:$0xf]
    %v2622 = vld [vmem:[#allocation10 + $0x70] sm:$0xf]
    %v2623 = vld [vmem:[#allocation10 + $0x74] sm:$0xf]
    %v2624 = vld [vmem:[#allocation10 + $0x78] sm:$0xf]
    %v2625 = vld [vmem:[#allocation10 + $0x7c] sm:$0xf]
    %v2626 = vld [vmem:[#allocation10 + $0x80] sm:$0xf]
    %v2627 = vld [vmem:[#allocation10 + $0x84] sm:$0xf]
    %v2628 = vld [vmem:[#allocation10 + $0x88] sm:$0xf]
    %v2629 = vld [vmem:[#allocation10 + $0x8c] sm:$0xf]
    %v2630 = vld [vmem:[#allocation10 + $0x90] sm:$0xf]
    %v2631 = vld [vmem:[#allocation10 + $0x94] sm:$0xf]
    %v2632 = vld [vmem:[#allocation10 + $0x98] sm:$0xf]
    %v2633 = vld [vmem:[#allocation10 + $0x9c] sm:$0xf]
    %v2634 = vld [vmem:[#allocation10 + $0xa0] sm:$0xf]
    %v2635 = vld [vmem:[#allocation10 + $0xa4] sm:$0xf]
    %v2636 = vld [vmem:[#allocation10 + $0xa8] sm:$0xf]
    %v2637 = vld [vmem:[#allocation10 + $0xac] sm:$0xf]
    %v2638 = vld [vmem:[#allocation10 + $0xb0] sm:$0xf]
    %v2639 = vld [vmem:[#allocation10 + $0xb4] sm:$0xf]
    %v2640 = vld [vmem:[#allocation10 + $0xb8] sm:$0xf]
    %v2641 = vld [vmem:[#allocation10 + $0xbc] sm:$0xf]
    %v2642 = vld [vmem:[#allocation10 + $0xc0] sm:$0xf]
    %v2643 = vld [vmem:[#allocation10 + $0xc4] sm:$0xf]
    %v2644 = vld [vmem:[#allocation10 + $0xc8] sm:$0xf]
    %v2645 = vld [vmem:[#allocation10 + $0xcc] sm:$0xf]
    %v2646 = vld [vmem:[#allocation10 + $0xd0] sm:$0xf]
    %v2647 = vld [vmem:[#allocation10 + $0xd4] sm:$0xf]
    %v2648 = vld [vmem:[#allocation10 + $0xd8] sm:$0xf]
    %v2649 = vld [vmem:[#allocation10 + $0xdc] sm:$0xf]
    %v2650 = vld [vmem:[#allocation10 + $0xe0] sm:$0xf]
    %v2651 = vld [vmem:[#allocation10 + $0xe4] sm:$0xf]
    %v2652 = vld [vmem:[#allocation10 + $0xe8] sm:$0xf]
    %v2653 = vld [vmem:[#allocation10 + $0xec] sm:$0xf]
    %v2654 = vld [vmem:[#allocation10 + $0xf0] sm:$0xf]
    %v2655 = vld [vmem:[#allocation10 + $0xf4] sm:$0xf]
    %v2656 = vld [vmem:[#allocation10 + $0xf8] sm:$0xf]
    %v2657 = vld [vmem:[#allocation10 + $0xfc] sm:$0xf]
    %v2658 = vld [vmem:[%s6] sm:$0x1]
    %v2660 = vlaneseq
    %v2661 = vshrl.u32 %v2660, 7
    %v2662 = vsub.s32 0, %v2661
    %v2663 = vrot.slane %v2658, %v2662
    %v2729 = vunpack.c.l.b16 %v2594
    %v2730 = vunpack.c.l.b16 %v2595
    %v2731 = vunpack.c.l.b16 %v2596
    %v2732 = vunpack.c.l.b16 %v2597
    %v2733 = vunpack.c.l.b16 %v2598
    %v2734 = vunpack.c.l.b16 %v2599
    %v2735 = vunpack.c.l.b16 %v2600
    %v2736 = vunpack.c.l.b16 %v2601
    %v2737 = vunpack.c.l.b16 %v2602
    %v2738 = vunpack.c.l.b16 %v2603
    %v2739 = vunpack.c.l.b16 %v2604
    %v2740 = vunpack.c.l.b16 %v2605
    %v2741 = vunpack.c.l.b16 %v2606
    %v2742 = vunpack.c.l.b16 %v2607
    %v2743 = vunpack.c.l.b16 %v2608
    %v2744 = vunpack.c.l.b16 %v2609
    %v2745 = vunpack.c.l.b16 %v2610
    %v2746 = vunpack.c.l.b16 %v2611
    %v2747 = vunpack.c.l.b16 %v2612
    %v2748 = vunpack.c.l.b16 %v2613
    %v2749 = vunpack.c.l.b16 %v2614
    %v2750 = vunpack.c.l.b16 %v2615
    %v2751 = vunpack.c.l.b16 %v2616
    %v2752 = vunpack.c.l.b16 %v2617
    %v2753 = vunpack.c.l.b16 %v2618
    %v2754 = vunpack.c.l.b16 %v2619
    %v2755 = vunpack.c.l.b16 %v2620
    %v2756 = vunpack.c.l.b16 %v2621
    %v2757 = vunpack.c.l.b16 %v2622
    %v2758 = vunpack.c.l.b16 %v2623
    %v2759 = vunpack.c.l.b16 %v2624
    %v2760 = vunpack.c.l.b16 %v2625
    %v2761 = vunpack.c.l.b16 %v2626
    %v2762 = vunpack.c.l.b16 %v2627
    %v2763 = vunpack.c.l.b16 %v2628
    %v2764 = vunpack.c.l.b16 %v2629
    %v2765 = vunpack.c.l.b16 %v2630
    %v2766 = vunpack.c.l.b16 %v2631
    %v2767 = vunpack.c.l.b16 %v2632
    %v2768 = vunpack.c.l.b16 %v2633
    %v2769 = vunpack.c.l.b16 %v2634
    %v2770 = vunpack.c.l.b16 %v2635
    %v2771 = vunpack.c.l.b16 %v2636
    %v2772 = vunpack.c.l.b16 %v2637
    %v2773 = vunpack.c.l.b16 %v2638
    %v2774 = vunpack.c.l.b16 %v2639
    %v2775 = vunpack.c.l.b16 %v2640
    %v2776 = vunpack.c.l.b16 %v2641
    %v2777 = vunpack.c.l.b16 %v2642
    %v2778 = vunpack.c.l.b16 %v2643
    %v2779 = vunpack.c.l.b16 %v2644
    %v2780 = vunpack.c.l.b16 %v2645
    %v2781 = vunpack.c.l.b16 %v2646
    %v2782 = vunpack.c.l.b16 %v2647
    %v2783 = vunpack.c.l.b16 %v2648
    %v2784 = vunpack.c.l.b16 %v2649
    %v2785 = vunpack.c.l.b16 %v2650
    %v2786 = vunpack.c.l.b16 %v2651
    %v2787 = vunpack.c.l.b16 %v2652
    %v2788 = vunpack.c.l.b16 %v2653
    %v2789 = vunpack.c.l.b16 %v2654
    %v2790 = vunpack.c.l.b16 %v2655
    %v2791 = vunpack.c.l.b16 %v2656
    %v2792 = vunpack.c.l.b16 %v2657
    %v2793 = vpack.c.b16 %v2730, %v2729
    %v2794 = vpack.c.b16 %v2732, %v2731
    %v2795 = vpack.c.b16 %v2734, %v2733
    %v2796 = vpack.c.b16 %v2736, %v2735
    %v2797 = vpack.c.b16 %v2738, %v2737
    %v2798 = vpack.c.b16 %v2740, %v2739
    %v2799 = vpack.c.b16 %v2742, %v2741
    %v2800 = vpack.c.b16 %v2744, %v2743
    %v2801 = vpack.c.b16 %v2746, %v2745
    %v2802 = vpack.c.b16 %v2748, %v2747
    %v2803 = vpack.c.b16 %v2750, %v2749
    %v2804 = vpack.c.b16 %v2752, %v2751
    %v2805 = vpack.c.b16 %v2754, %v2753
    %v2806 = vpack.c.b16 %v2756, %v2755
    %v2807 = vpack.c.b16 %v2758, %v2757
    %v2808 = vpack.c.b16 %v2760, %v2759
    %v2809 = vpack.c.b16 %v2762, %v2761
    %v2810 = vpack.c.b16 %v2764, %v2763
    %v2811 = vpack.c.b16 %v2766, %v2765
    %v2812 = vpack.c.b16 %v2768, %v2767
    %v2813 = vpack.c.b16 %v2770, %v2769
    %v2814 = vpack.c.b16 %v2772, %v2771
    %v2815 = vpack.c.b16 %v2774, %v2773
    %v2816 = vpack.c.b16 %v2776, %v2775
    %v2817 = vpack.c.b16 %v2778, %v2777
    %v2818 = vpack.c.b16 %v2780, %v2779
    %v2819 = vpack.c.b16 %v2782, %v2781
    %v2820 = vpack.c.b16 %v2784, %v2783
    %v2821 = vpack.c.b16 %v2786, %v2785
    %v2822 = vpack.c.b16 %v2788, %v2787
    %v2823 = vpack.c.b16 %v2790, %v2789
    %v2824 = vpack.c.b16 %v2792, %v2791
    %2857 = vmatprep.subr.bf16.mxu0 0
    %2858 = vmatpush1.bf16.msra.mxu0 %v2793
    %2859 = vmatprep.subr.bf16.mxu0 0
    %2860 = vmatpush1.bf16.msra.mxu0 %v2794
    %2861 = vmatprep.subr.bf16.mxu0 0
    %2862 = vmatpush1.bf16.msra.mxu0 %v2795
    %2863 = vmatprep.subr.bf16.mxu0 0
    %2864 = vmatpush1.bf16.msra.mxu0 %v2796
    %2865 = vmatprep.subr.bf16.mxu0 0
    %2866 = vmatpush1.bf16.msra.mxu0 %v2797
    %2867 = vmatprep.subr.bf16.mxu0 0
    %2868 = vmatpush1.bf16.msra.mxu0 %v2798
    %2869 = vmatprep.subr.bf16.mxu0 0
    %2870 = vmatpush1.bf16.msra.mxu0 %v2799
    %2871 = vmatprep.subr.bf16.mxu0 0
    %2872 = vmatpush1.bf16.msra.mxu0 %v2800
    %2873 = vmatprep.subr.bf16.mxu0 0
    %2874 = vmatpush1.bf16.msra.mxu0 %v2801
    %2875 = vmatprep.subr.bf16.mxu0 0
    %2876 = vmatpush1.bf16.msra.mxu0 %v2802
    %2877 = vmatprep.subr.bf16.mxu0 0
    %2878 = vmatpush1.bf16.msra.mxu0 %v2803
    %2879 = vmatprep.subr.bf16.mxu0 0
    %2880 = vmatpush1.bf16.msra.mxu0 %v2804
    %2881 = vmatprep.subr.bf16.mxu0 0
    %2882 = vmatpush1.bf16.msra.mxu0 %v2805
    %2883 = vmatprep.subr.bf16.mxu0 0
    %2884 = vmatpush1.bf16.msra.mxu0 %v2806
    %2885 = vmatprep.subr.bf16.mxu0 0
    %2886 = vmatpush1.bf16.msra.mxu0 %v2807
    %2887 = vmatprep.subr.bf16.mxu0 0
    %2888 = vmatpush1.bf16.msra.mxu0 %v2808
    %2889 = vmatprep.mubr.bf16.mxu0 %v2591
    %2890 = vmatmul.mubr.bf16.gmra.mrb[0].mxu0 %v2590
    %v2891 = vpop.f32.mrb[0].mxu0
    %v2892 = vadd.f32 %v2663, %v2891
    %v2893 = vpop.f32.mrb[0].mxu0
    %v2894 = vpop.f32.mrb[0].mxu0
    %v2895 = vpop.f32.mrb[0].mxu0
    %2896 = vdwg.mxu0
    %2897 = vmatprep.subr.bf16.mxu0 0
    %2898 = vmatpush1.bf16.msra.mxu0 %v2809
    %2899 = vmatprep.subr.bf16.mxu0 0
    %2900 = vmatpush1.bf16.msra.mxu0 %v2810
    %2901 = vmatprep.subr.bf16.mxu0 0
    %2902 = vmatpush1.bf16.msra.mxu0 %v2811
    %2903 = vmatprep.subr.bf16.mxu0 0
    %2904 = vmatpush1.bf16.msra.mxu0 %v2812
    %2905 = vmatprep.subr.bf16.mxu0 0
    %2906 = vmatpush1.bf16.msra.mxu0 %v2813
    %2907 = vmatprep.subr.bf16.mxu0 0
    %2908 = vmatpush1.bf16.msra.mxu0 %v2814
    %2909 = vmatprep.subr.bf16.mxu0 0
    %2910 = vmatpush1.bf16.msra.mxu0 %v2815
    %2911 = vmatprep.subr.bf16.mxu0 0
    %2912 = vmatpush1.bf16.msra.mxu0 %v2816
    %2913 = vmatprep.subr.bf16.mxu0 0
    %2914 = vmatpush1.bf16.msra.mxu0 %v2817
    %2915 = vmatprep.subr.bf16.mxu0 0
    %2916 = vmatpush1.bf16.msra.mxu0 %v2818
    %2917 = vmatprep.subr.bf16.mxu0 0
    %2918 = vmatpush1.bf16.msra.mxu0 %v2819
    %2919 = vmatprep.subr.bf16.mxu0 0
    %2920 = vmatpush1.bf16.msra.mxu0 %v2820
    %2921 = vmatprep.subr.bf16.mxu0 0
    %2922 = vmatpush1.bf16.msra.mxu0 %v2821
    %2923 = vmatprep.subr.bf16.mxu0 0
    %2924 = vmatpush1.bf16.msra.mxu0 %v2822
    %2925 = vmatprep.subr.bf16.mxu0 0
    %2926 = vmatpush1.bf16.msra.mxu0 %v2823
    %2927 = vmatprep.subr.bf16.mxu0 0
    %2928 = vmatpush1.bf16.msra.mxu0 %v2824
    %2929 = vmatprep.mubr.bf16.mxu0 %v2593
    %2930 = vmatmul.mubr.bf16.gmra.mrb[0].mxu0 %v2592
    %v2931 = vpop.f32.mrb[0].mxu0
    %v2932 = vadd.f32 %v2892, %v2931
    %v2933 = vpop.f32.mrb[0].mxu0
    %v2934 = vpop.f32.mrb[0].mxu0
    %v2935 = vpop.f32.mrb[0].mxu0
    %2936 = vdwg.mxu0
    %2937 = vst [vmem:[#allocation11] sm:$0xff] %v2932
    // Predicated region
    $region50: #{tpu_custom_call.1} parent=1 // pred_check
      _
    $region51: #{tpu_custom_call.1} parent=1 // pred_check_branch
      %2939 = sbr.rel (0) target = $region53
    $region52: #{tpu_custom_call.1} parent=1 // pred_region
      %s2941 = ssub.s32 128, 128
      %2942 = vsyncadd [#allocation4], %s2941
      %s2944 = sshll.u32 [#allocation11], 4
      %s2945 = int_to_ptr.vmem [resolvable:$true] %s2944
      %2947 = dma.vmem_to_hbm [thread:$0]  %s2945, 128, %s7, [#allocation4]
    $region53: #{tpu_custom_call.1} parent=1 // pred_fallthru
      _
    // Predicated region
    $region54: #{tpu_custom_call.1} parent=1 // pred_check
      _
    $region55: #{tpu_custom_call.1} parent=1 // pred_check_branch
      %2949 = sbr.rel (0) target = $region57
    $region56: #{tpu_custom_call.1} parent=1 // pred_region
      %2950 = dma.done [#allocation4], 128
    $region57: #{tpu_custom_call.1} parent=1 // pred_fallthru
      _
    %2951 = vsyncpa [#allocation3], 1
    %2952 = vsyncpa [#allocation6], 1
    %2953 = vsyncpa [#allocation9], 1
    %2954 = vsyncpa [#allocation4], 1

</llo_original>
